<compile_context>
chip_gen: v6e
topology: v6e:2x2x1
jax: 0.10.0
libtpu: 0.0.40
codegen_flags: <defaults>
</compile_context>

<pallas_src>
import math

import jax
import jax.numpy as jnp
from jax.experimental import pallas as pl
from jax.experimental.pallas import tpu as pltpu  # noqa: F401  (TPU backend)


def _full_spec(shape):
    # Gridless full-array block resident in VMEM.
    return pl.BlockSpec(shape, lambda: (0,) * len(shape))


# ----------------------------------------------------------------------------
# Kernel: conv (im2col matmul) + bias + ReLU + 2x2 maxpool, fully fused.
# p0..p3 are the im2col matrices of the four maxpool taps; pooling is the
# elementwise max of the four (matmul + bias) results, then one ReLU.
# ----------------------------------------------------------------------------
def _conv_relu_pool_kernel(p0_ref, p1_ref, p2_ref, p3_ref, w_ref, b_ref, o_ref):
    w = w_ref[...]                       # (K, Cout) bf16
    b = b_ref[...]                       # (1, Cout) f32, broadcasts over rows

    def tap(p_ref):
        return jnp.dot(p_ref[...].astype(jnp.bfloat16), w,
                       preferred_element_type=jnp.float32) + b

    y = jnp.maximum(jnp.maximum(tap(p0_ref), tap(p1_ref)),
                    jnp.maximum(tap(p2_ref), tap(p3_ref)))
    o_ref[...] = jnp.maximum(y, 0.0).astype(o_ref.dtype)


def conv_relu_pool(x_nhwc, w_oihw, b, *, padding):
    """Conv2d(stride=1) + ReLU + MaxPool2d(2,2) on NHWC input -> NHWC output."""
    B, H, W, Cin = x_nhwc.shape
    Cout, Cin2, KH, KW = w_oihw.shape
    assert Cin == Cin2
    if padding:
        x_nhwc = jnp.pad(
            x_nhwc, ((0, 0), (padding, padding), (padding, padding), (0, 0)))
    Hp, Wp = x_nhwc.shape[1], x_nhwc.shape[2]
    OH, OW = Hp - KH + 1, Wp - KW + 1       # conv output (pre-pool)
    PH, PW = OH // 2, OW // 2               # pooled output
    K = KH * KW * Cin
    M = B * PH * PW

    # im2col at full conv resolution (XLA glue on tiny tensors; patch layout
    # is (kh, kw, cin) to match the weight matrix below).
    cols = []
    for i in range(KH):
        for j in range(KW):
            cols.append(x_nhwc[:, i:i + OH, j:j + OW, :])
    pf = jnp.stack(cols, axis=3).reshape(B, OH, OW, K)

    # One im2col matrix per 2x2 pool tap; rows ordered (b, oh, ow) of pooled grid.
    taps = [pf[:, ph::2, pw::2, :].reshape(M, K)
            for ph in range(2) for pw in range(2)]

    # Weight (Cout, Cin, KH, KW) -> (KH*KW*Cin, Cout); bf16 for the MXU.
    w_mat = (jnp.transpose(w_oihw, (2, 3, 1, 0))
             .reshape(K, Cout).astype(jnp.bfloat16))
    b2 = b.reshape(1, Cout).astype(jnp.float32)

    out = pl.pallas_call(
        _conv_relu_pool_kernel,
        out_shape=jax.ShapeDtypeStruct((M, Cout), jnp.float32),
        in_specs=[_full_spec((M, K))] * 4
                 + [_full_spec((K, Cout)), _full_spec((1, Cout))],
        out_specs=_full_spec((M, Cout)),
    )(*taps, w_mat, b2)
    return out.reshape(B, PH, PW, Cout)


# ----------------------------------------------------------------------------
# Kernel: fused FC stack fc1+ReLU -> fc2+ReLU -> fc3 (intermediates stay in VMEM).
# ----------------------------------------------------------------------------
def _fc_stack_kernel(x_ref, w1_ref, b1_ref, w2_ref, b2_ref, w3_ref, b3_ref, o_ref):
    h = x_ref[...].astype(jnp.bfloat16)
    h = jnp.dot(h, w1_ref[...], preferred_element_type=jnp.float32) + b1_ref[...]
    h = jnp.maximum(h, 0.0).astype(jnp.bfloat16)
    h = jnp.dot(h, w2_ref[...], preferred_element_type=jnp.float32) + b2_ref[...]
    h = jnp.maximum(h, 0.0).astype(jnp.bfloat16)
    h = jnp.dot(h, w3_ref[...], preferred_element_type=jnp.float32) + b3_ref[...]
    o_ref[...] = h.astype(o_ref.dtype)


def fc_stack(x_bhwc, params):
    """Flatten + Linear(400,120)+ReLU + Linear(120,84)+ReLU + Linear(84,2)."""
    B, PH, PW, C = x_bhwc.shape
    x = x_bhwc.reshape(B, PH * PW * C)            # HWC-order flatten (plain reshape)

    # Fold PyTorch's CHW flatten order into fc1's weight rows (free, weights only):
    # torch row index  c*PH*PW + h*PW + w   ->   our column index  h*PW*C + w*C + c.
    w1 = (params["fc1_w"].reshape(C, PH, PW, -1)
          .transpose(1, 2, 0, 3).reshape(PH * PW * C, -1).astype(jnp.bfloat16))
    w2 = params["fc2_w"].astype(jnp.bfloat16)
    w3 = params["fc3_w"].astype(jnp.bfloat16)
    b1 = params["fc1_b"].reshape(1, -1)
    b2 = params["fc2_b"].reshape(1, -1)
    b3 = params["fc3_b"].reshape(1, -1)

    n_out = w3.shape[1]
    return pl.pallas_call(
        _fc_stack_kernel,
        out_shape=jax.ShapeDtypeStruct((B, n_out), jnp.float32),
        in_specs=[_full_spec(a.shape) for a in (x, w1, b1, w2, b2, w3, b3)],
        out_specs=_full_spec((B, n_out)),
    )(x, w1, b1, w2, b2, w3, b3)


# ----------------------------------------------------------------------------
# LeNet forward
# ----------------------------------------------------------------------------
def lenet_forward(x_nchw, params):
    """x_nchw: (B, 3, 28, 28) float32 -> logits (B, 2)."""
    x = jnp.transpose(x_nchw, (0, 2, 3, 1))                       # NCHW -> NHWC
    y = conv_relu_pool(x, params["conv1_w"], params["conv1_b"], padding=2)  # (B,14,14,6)
    y = conv_relu_pool(y, params["conv2_w"], params["conv2_b"], padding=0)  # (B,5,5,16)
    return fc_stack(y, params)                                    # (B, 2)


def init_params(key):
    """Deterministic, PyTorch-default-style uniform(-1/sqrt(fan_in), ...)."""
    def uinit(k, shape, fan_in):
        bound = 1.0 / math.sqrt(fan_in)
        return jax.random.uniform(k, shape, jnp.float32, -bound, bound)

    ks = jax.random.split(key, 10)
    return {
        "conv1_w": uinit(ks[0], (6, 3, 5, 5), 3 * 5 * 5),
        "conv1_b": uinit(ks[1], (6,), 3 * 5 * 5),
        "conv2_w": uinit(ks[2], (16, 6, 5, 5), 6 * 5 * 5),
        "conv2_b": uinit(ks[3], (16,), 6 * 5 * 5),
        # Linear weights stored as (in, out) so kernels compute x @ W.
        "fc1_w": uinit(ks[4], (400, 120), 400),
        "fc1_b": uinit(ks[5], (120,), 400),
        "fc2_w": uinit(ks[6], (120, 84), 120),
        "fc2_b": uinit(ks[7], (84,), 120),
        "fc3_w": uinit(ks[8], (84, 2), 84),
        "fc3_b": uinit(ks[9], (2,), 84),
    }


if __name__ == "__main__":
    key = jax.random.PRNGKey(0)
    k_x, k_p = jax.random.split(key)
    # LeNet's Flatten->Linear(400,...) implies 28x28 spatial input with 3 channels.
    x = jax.random.normal(k_x, (2, 3, 28, 28), dtype=jnp.float32)
    params = init_params(k_p)

    fwd = jax.jit(lenet_forward)
    logits = fwd(x, params)
    jax.block_until_ready(logits)
    assert logits.shape == (2, 2) and logits.dtype == jnp.float32
    print("KERNEL_OK")
</pallas_src>

<mosaic_0001>
module attributes {stable_mosaic.version = 11 : i64} {
  func.func @_conv_relu_pool_kernel(%arg0: memref<392x75xf32, #tpu.memory_space<vmem>>, %arg1: memref<392x75xf32, #tpu.memory_space<vmem>>, %arg2: memref<392x75xf32, #tpu.memory_space<vmem>>, %arg3: memref<392x75xf32, #tpu.memory_space<vmem>>, %arg4: memref<75x6xbf16, #tpu.memory_space<vmem>>, %arg5: memref<1x6xf32, #tpu.memory_space<vmem>>, %arg6: memref<392x6xf32, #tpu.memory_space<vmem>>) attributes {dimension_semantics = [], scalar_prefetch = 0 : i64, scratch_operands = 0 : i64, tpu.core_type = #tpu.core_type<tc>} {
    %c0 = arith.constant 0 : index
    %c0_0 = arith.constant 0 : index
    %0 = vector.load %arg4[%c0, %c0_0] : memref<75x6xbf16, #tpu.memory_space<vmem>>, vector<75x6xbf16>
    %c0_1 = arith.constant 0 : index
    %c0_2 = arith.constant 0 : index
    %1 = vector.load %arg5[%c0_1, %c0_2] : memref<1x6xf32, #tpu.memory_space<vmem>>, vector<1x6xf32>
    %c0_3 = arith.constant 0 : index
    %c0_4 = arith.constant 0 : index
    %2 = vector.load %arg0[%c0_3, %c0_4] : memref<392x75xf32, #tpu.memory_space<vmem>>, vector<392x75xf32>
    %3 = arith.truncf %2 : vector<392x75xf32> to vector<392x75xbf16>
    %cst = arith.constant dense<0.000000e+00> : vector<392x6xf32>
    %4 = tpu.matmul %3, %0, %cst {dimension_numbers = #tpu.dot_dimension_numbers<[1], [0], [0], [1], [0, 0, 1, 1], [], []>} : vector<392x75xbf16>, vector<75x6xbf16>, vector<392x6xf32> -> vector<392x6xf32>
    %5 = vector.broadcast %1 : vector<1x6xf32> to vector<392x6xf32>
    %6 = arith.addf %4, %5 : vector<392x6xf32>
    %c0_5 = arith.constant 0 : index
    %c0_6 = arith.constant 0 : index
    %7 = vector.load %arg1[%c0_5, %c0_6] : memref<392x75xf32, #tpu.memory_space<vmem>>, vector<392x75xf32>
    %8 = arith.truncf %7 : vector<392x75xf32> to vector<392x75xbf16>
    %cst_7 = arith.constant dense<0.000000e+00> : vector<392x6xf32>
    %9 = tpu.matmul %8, %0, %cst_7 {dimension_numbers = #tpu.dot_dimension_numbers<[1], [0], [0], [1], [0, 0, 1, 1], [], []>} : vector<392x75xbf16>, vector<75x6xbf16>, vector<392x6xf32> -> vector<392x6xf32>
    %10 = vector.broadcast %1 : vector<1x6xf32> to vector<392x6xf32>
    %11 = arith.addf %9, %10 : vector<392x6xf32>
    %12 = arith.maximumf %6, %11 : vector<392x6xf32>
    %c0_8 = arith.constant 0 : index
    %c0_9 = arith.constant 0 : index
    %13 = vector.load %arg2[%c0_8, %c0_9] : memref<392x75xf32, #tpu.memory_space<vmem>>, vector<392x75xf32>
    %14 = arith.truncf %13 : vector<392x75xf32> to vector<392x75xbf16>
    %cst_10 = arith.constant dense<0.000000e+00> : vector<392x6xf32>
    %15 = tpu.matmul %14, %0, %cst_10 {dimension_numbers = #tpu.dot_dimension_numbers<[1], [0], [0], [1], [0, 0, 1, 1], [], []>} : vector<392x75xbf16>, vector<75x6xbf16>, vector<392x6xf32> -> vector<392x6xf32>
    %16 = vector.broadcast %1 : vector<1x6xf32> to vector<392x6xf32>
    %17 = arith.addf %15, %16 : vector<392x6xf32>
    %c0_11 = arith.constant 0 : index
    %c0_12 = arith.constant 0 : index
    %18 = vector.load %arg3[%c0_11, %c0_12] : memref<392x75xf32, #tpu.memory_space<vmem>>, vector<392x75xf32>
    %19 = arith.truncf %18 : vector<392x75xf32> to vector<392x75xbf16>
    %cst_13 = arith.constant dense<0.000000e+00> : vector<392x6xf32>
    %20 = tpu.matmul %19, %0, %cst_13 {dimension_numbers = #tpu.dot_dimension_numbers<[1], [0], [0], [1], [0, 0, 1, 1], [], []>} : vector<392x75xbf16>, vector<75x6xbf16>, vector<392x6xf32> -> vector<392x6xf32>
    %21 = vector.broadcast %1 : vector<1x6xf32> to vector<392x6xf32>
    %22 = arith.addf %20, %21 : vector<392x6xf32>
    %23 = arith.maximumf %17, %22 : vector<392x6xf32>
    %24 = arith.maximumf %12, %23 : vector<392x6xf32>
    %cst_14 = arith.constant 0.000000e+00 : f32
    %25 = vector.broadcast %cst_14 : f32 to vector<392x6xf32>
    %26 = arith.maximumf %24, %25 : vector<392x6xf32>
    %c0_15 = arith.constant 0 : index
    %c0_16 = arith.constant 0 : index
    %27 = vector.load %arg6[%c0_15, %c0_16] : memref<392x6xf32, #tpu.memory_space<vmem>>, vector<392x6xf32>
    tpu.vector_store %arg6[%c0_15, %c0_16], %26 {strides = array<i32>} : memref<392x6xf32, #tpu.memory_space<vmem>>, vector<392x6xf32>,
    return
  }
}

module attributes {stable_mosaic.version = 11 : i64} {
  func.func @_conv_relu_pool_kernel(%arg0: memref<50x150xf32, #tpu.memory_space<vmem>>, %arg1: memref<50x150xf32, #tpu.memory_space<vmem>>, %arg2: memref<50x150xf32, #tpu.memory_space<vmem>>, %arg3: memref<50x150xf32, #tpu.memory_space<vmem>>, %arg4: memref<150x16xbf16, #tpu.memory_space<vmem>>, %arg5: memref<1x16xf32, #tpu.memory_space<vmem>>, %arg6: memref<50x16xf32, #tpu.memory_space<vmem>>) attributes {dimension_semantics = [], scalar_prefetch = 0 : i64, scratch_operands = 0 : i64, tpu.core_type = #tpu.core_type<tc>} {
    %c0 = arith.constant 0 : index
    %c0_0 = arith.constant 0 : index
    %0 = vector.load %arg4[%c0, %c0_0] : memref<150x16xbf16, #tpu.memory_space<vmem>>, vector<150x16xbf16>
    %c0_1 = arith.constant 0 : index
    %c0_2 = arith.constant 0 : index
    %1 = vector.load %arg5[%c0_1, %c0_2] : memref<1x16xf32, #tpu.memory_space<vmem>>, vector<1x16xf32>
    %c0_3 = arith.constant 0 : index
    %c0_4 = arith.constant 0 : index
    %2 = vector.load %arg0[%c0_3, %c0_4] : memref<50x150xf32, #tpu.memory_space<vmem>>, vector<50x150xf32>
    %3 = arith.truncf %2 : vector<50x150xf32> to vector<50x150xbf16>
    %cst = arith.constant dense<0.000000e+00> : vector<50x16xf32>
    %4 = tpu.matmul %3, %0, %cst {dimension_numbers = #tpu.dot_dimension_numbers<[1], [0], [0], [1], [0, 0, 1, 1], [], []>} : vector<50x150xbf16>, vector<150x16xbf16>, vector<50x16xf32> -> vector<50x16xf32>
    %5 = vector.broadcast %1 : vector<1x16xf32> to vector<50x16xf32>
    %6 = arith.addf %4, %5 : vector<50x16xf32>
    %c0_5 = arith.constant 0 : index
    %c0_6 = arith.constant 0 : index
    %7 = vector.load %arg1[%c0_5, %c0_6] : memref<50x150xf32, #tpu.memory_space<vmem>>, vector<50x150xf32>
    %8 = arith.truncf %7 : vector<50x150xf32> to vector<50x150xbf16>
    %cst_7 = arith.constant dense<0.000000e+00> : vector<50x16xf32>
    %9 = tpu.matmul %8, %0, %cst_7 {dimension_numbers = #tpu.dot_dimension_numbers<[1], [0], [0], [1], [0, 0, 1, 1], [], []>} : vector<50x150xbf16>, vector<150x16xbf16>, vector<50x16xf32> -> vector<50x16xf32>
    %10 = vector.broadcast %1 : vector<1x16xf32> to vector<50x16xf32>
    %11 = arith.addf %9, %10 : vector<50x16xf32>
    %12 = arith.maximumf %6, %11 : vector<50x16xf32>
    %c0_8 = arith.constant 0 : index
    %c0_9 = arith.constant 0 : index
    %13 = vector.load %arg2[%c0_8, %c0_9] : memref<50x150xf32, #tpu.memory_space<vmem>>, vector<50x150xf32>
    %14 = arith.truncf %13 : vector<50x150xf32> to vector<50x150xbf16>
    %cst_10 = arith.constant dense<0.000000e+00> : vector<50x16xf32>
    %15 = tpu.matmul %14, %0, %cst_10 {dimension_numbers = #tpu.dot_dimension_numbers<[1], [0], [0], [1], [0, 0, 1, 1], [], []>} : vector<50x150xbf16>, vector<150x16xbf16>, vector<50x16xf32> -> vector<50x16xf32>
    %16 = vector.broadcast %1 : vector<1x16xf32> to vector<50x16xf32>
    %17 = arith.addf %15, %16 : vector<50x16xf32>
    %c0_11 = arith.constant 0 : index
    %c0_12 = arith.constant 0 : index
    %18 = vector.load %arg3[%c0_11, %c0_12] : memref<50x150xf32, #tpu.memory_space<vmem>>, vector<50x150xf32>
    %19 = arith.truncf %18 : vector<50x150xf32> to vector<50x150xbf16>
    %cst_13 = arith.constant dense<0.000000e+00> : vector<50x16xf32>
    %20 = tpu.matmul %19, %0, %cst_13 {dimension_numbers = #tpu.dot_dimension_numbers<[1], [0], [0], [1], [0, 0, 1, 1], [], []>} : vector<50x150xbf16>, vector<150x16xbf16>, vector<50x16xf32> -> vector<50x16xf32>
    %21 = vector.broadcast %1 : vector<1x16xf32> to vector<50x16xf32>
    %22 = arith.addf %20, %21 : vector<50x16xf32>
    %23 = arith.maximumf %17, %22 : vector<50x16xf32>
    %24 = arith.maximumf %12, %23 : vector<50x16xf32>
    %cst_14 = arith.constant 0.000000e+00 : f32
    %25 = vector.broadcast %cst_14 : f32 to vector<50x16xf32>
    %26 = arith.maximumf %24, %25 : vector<50x16xf32>
    %c0_15 = arith.constant 0 : index
    %c0_16 = arith.constant 0 : index
    %27 = vector.load %arg6[%c0_15, %c0_16] : memref<50x16xf32, #tpu.memory_space<vmem>>, vector<50x16xf32>
    tpu.vector_store %arg6[%c0_15, %c0_16], %26 {strides = array<i32>} : memref<50x16xf32, #tpu.memory_space<vmem>>, vector<50x16xf32>,
    return
  }
}

module attributes {stable_mosaic.version = 11 : i64} {
  func.func @_fc_stack_kernel(%arg0: memref<2x400xf32, #tpu.memory_space<vmem>>, %arg1: memref<400x120xbf16, #tpu.memory_space<vmem>>, %arg2: memref<1x120xf32, #tpu.memory_space<vmem>>, %arg3: memref<120x84xbf16, #tpu.memory_space<vmem>>, %arg4: memref<1x84xf32, #tpu.memory_space<vmem>>, %arg5: memref<84x2xbf16, #tpu.memory_space<vmem>>, %arg6: memref<1x2xf32, #tpu.memory_space<vmem>>, %arg7: memref<2x2xf32, #tpu.memory_space<vmem>>) attributes {dimension_semantics = [], scalar_prefetch = 0 : i64, scratch_operands = 0 : i64, tpu.core_type = #tpu.core_type<tc>} {
    %c0 = arith.constant 0 : index
    %c0_0 = arith.constant 0 : index
    %0 = vector.load %arg0[%c0, %c0_0] : memref<2x400xf32, #tpu.memory_space<vmem>>, vector<2x400xf32>
    %1 = arith.truncf %0 : vector<2x400xf32> to vector<2x400xbf16>
    %c0_1 = arith.constant 0 : index
    %c0_2 = arith.constant 0 : index
    %2 = vector.load %arg1[%c0_1, %c0_2] : memref<400x120xbf16, #tpu.memory_space<vmem>>, vector<400x120xbf16>
    %cst = arith.constant dense<0.000000e+00> : vector<2x120xf32>
    %3 = tpu.matmul %1, %2, %cst {dimension_numbers = #tpu.dot_dimension_numbers<[1], [0], [0], [1], [0, 0, 1, 1], [], []>} : vector<2x400xbf16>, vector<400x120xbf16>, vector<2x120xf32> -> vector<2x120xf32>
    %c0_3 = arith.constant 0 : index
    %c0_4 = arith.constant 0 : index
    %4 = vector.load %arg2[%c0_3, %c0_4] : memref<1x120xf32, #tpu.memory_space<vmem>>, vector<1x120xf32>
    %5 = vector.broadcast %4 : vector<1x120xf32> to vector<2x120xf32>
    %6 = arith.addf %3, %5 : vector<2x120xf32>
    %cst_5 = arith.constant 0.000000e+00 : f32
    %7 = vector.broadcast %cst_5 : f32 to vector<2x120xf32>
    %8 = arith.maximumf %6, %7 : vector<2x120xf32>
    %9 = arith.truncf %8 : vector<2x120xf32> to vector<2x120xbf16>
    %c0_6 = arith.constant 0 : index
    %c0_7 = arith.constant 0 : index
    %10 = vector.load %arg3[%c0_6, %c0_7] : memref<120x84xbf16, #tpu.memory_space<vmem>>, vector<120x84xbf16>
    %cst_8 = arith.constant dense<0.000000e+00> : vector<2x84xf32>
    %11 = tpu.matmul %9, %10, %cst_8 {dimension_numbers = #tpu.dot_dimension_numbers<[1], [0], [0], [1], [0, 0, 1, 1], [], []>} : vector<2x120xbf16>, vector<120x84xbf16>, vector<2x84xf32> -> vector<2x84xf32>
    %c0_9 = arith.constant 0 : index
    %c0_10 = arith.constant 0 : index
    %12 = vector.load %arg4[%c0_9, %c0_10] : memref<1x84xf32, #tpu.memory_space<vmem>>, vector<1x84xf32>
    %13 = vector.broadcast %12 : vector<1x84xf32> to vector<2x84xf32>
    %14 = arith.addf %11, %13 : vector<2x84xf32>
    %cst_11 = arith.constant 0.000000e+00 : f32
    %15 = vector.broadcast %cst_11 : f32 to vector<2x84xf32>
    %16 = arith.maximumf %14, %15 : vector<2x84xf32>
    %17 = arith.truncf %16 : vector<2x84xf32> to vector<2x84xbf16>
    %c0_12 = arith.constant 0 : index
    %c0_13 = arith.constant 0 : index
    %18 = vector.load %arg5[%c0_12, %c0_13] : memref<84x2xbf16, #tpu.memory_space<vmem>>, vector<84x2xbf16>
    %cst_14 = arith.constant dense<0.000000e+00> : vector<2x2xf32>
    %19 = tpu.matmul %17, %18, %cst_14 {dimension_numbers = #tpu.dot_dimension_numbers<[1], [0], [0], [1], [0, 0, 1, 1], [], []>} : vector<2x84xbf16>, vector<84x2xbf16>, vector<2x2xf32> -> vector<2x2xf32>
    %c0_15 = arith.constant 0 : index
    %c0_16 = arith.constant 0 : index
    %20 = vector.load %arg6[%c0_15, %c0_16] : memref<1x2xf32, #tpu.memory_space<vmem>>, vector<1x2xf32>
    %21 = vector.broadcast %20 : vector<1x2xf32> to vector<2x2xf32>
    %22 = arith.addf %19, %21 : vector<2x2xf32>
    %c0_17 = arith.constant 0 : index
    %c0_18 = arith.constant 0 : index
    %23 = vector.load %arg7[%c0_17, %c0_18] : memref<2x2xf32, #tpu.memory_space<vmem>>, vector<2x2xf32>
    tpu.vector_store %arg7[%c0_17, %c0_18], %22 {strides = array<i32>} : memref<2x2xf32, #tpu.memory_space<vmem>>, vector<2x2xf32>,
    return
  }
}

</mosaic_0001>

<llo_original>
// kernel: lenet_forward.3
$region0: #{lenet_forward.3}
  #allocation0 [shape = 'u32[]', space=smem, size = 0x4, offset = 0x4, fixed_abs, tag = 'smem constant byte address 0x4 - core index']
  #allocation1 [shape = 'u32[144,128]{1,0:T(1,128)}', space=vmem, size = 0x12000, scoped, tag = 'internal scratch']
  %s0 = inlined_call_operand.vmem [shape: f32[392,75], index: 0, kind: input, shape index: {}]
  %s1 = inlined_call_operand.vmem [shape: f32[392,75], index: 1, kind: input, shape index: {}]
  %s2 = inlined_call_operand.vmem [shape: f32[392,75], index: 2, kind: input, shape index: {}]
  %s3 = inlined_call_operand.vmem [shape: f32[392,75], index: 3, kind: input, shape index: {}]
  %s4 = inlined_call_operand.vmem [shape: bf16[75,6], index: 4, kind: input, shape index: {}]
  %s5 = inlined_call_operand.vmem [shape: f32[1,6], index: 5, kind: input, shape index: {}]
  %s6 = inlined_call_operand.vmem [shape: f32[392,6], index: 6, kind: output, shape index: {}]
  %s7 = sld [smem:[#allocation0]]
  $region34: #{lenet_forward.3} parent=0
    _
  %s9 = ssub.s32 1, %s7
  %s10 = scalar_select 0, %s9, %s7
  // Predicated region
  $region2: #{lenet_forward.3} parent=0 // pred_check
    _
  $region3: #{lenet_forward.3} parent=0 // pred_check_branch
    %12 = sbr.rel (0) target = $region5
  $region4: #{lenet_forward.3} parent=0 // pred_region
    _
  $region5: #{lenet_forward.3} parent=0 // pred_fallthru
    _
  // Predicated region
  $region6: #{lenet_forward.3} parent=0 // pred_check
    _
  $region7: #{lenet_forward.3} parent=0 // pred_check_branch
    %14 = sbr.rel (0) target = $region9
  $region8: #{lenet_forward.3} parent=0 // pred_region
    _
  $region9: #{lenet_forward.3} parent=0 // pred_fallthru
    _
  // Predicated region
  $region10: #{lenet_forward.3} parent=0 // pred_check
    _
  $region11: #{lenet_forward.3} parent=0 // pred_check_branch
    %16 = sbr.rel (0) target = $region13
  $region12: #{lenet_forward.3} parent=0 // pred_region
    _
  $region13: #{lenet_forward.3} parent=0 // pred_fallthru
    _
  // Predicated region
  $region14: #{lenet_forward.3} parent=0 // pred_check
    _
  $region15: #{lenet_forward.3} parent=0 // pred_check_branch
    %18 = sbr.rel (0) target = $region17
  $region16: #{lenet_forward.3} parent=0 // pred_region
    _
  $region17: #{lenet_forward.3} parent=0 // pred_fallthru
    _
  // Predicated region
  $region18: #{lenet_forward.3} parent=0 // pred_check
    _
  $region19: #{lenet_forward.3} parent=0 // pred_check_branch
    %20 = sbr.rel (0) target = $region21
  $region20: #{lenet_forward.3} parent=0 // pred_region
    _
  $region21: #{lenet_forward.3} parent=0 // pred_fallthru
    _
  // Predicated region
  $region22: #{lenet_forward.3} parent=0 // pred_check
    _
  $region23: #{lenet_forward.3} parent=0 // pred_check_branch
    %22 = sbr.rel (0) target = $region25
  $region24: #{lenet_forward.3} parent=0 // pred_region
    _
  $region25: #{lenet_forward.3} parent=0 // pred_fallthru
    _
  %v24 = vld [vmem:[%s4] sm:$0xf]
  %v25 = vld [vmem:[%s4 + $0x4] sm:$0xf]
  %v26 = vld [vmem:[%s4 + $0x8] sm:$0xf]
  %v27 = vld [vmem:[%s4 + $0xc] sm:$0xf]
  %v28 = vld [vmem:[%s4 + $0x10] sm:$0xf]
  %v29 = vld [vmem:[%s4 + $0x14] sm:$0xf]
  %v30 = vld [vmem:[%s4 + $0x18] sm:$0xf]
  %v31 = vld [vmem:[%s4 + $0x1c] sm:$0xf]
  %v32 = vld [vmem:[%s4 + $0x20] sm:$0xf]
  %v33 = vld [vmem:[%s4 + $0x24] sm:$0x3]
  %v34 = vld [vmem:[%s5] sm:$0x1]
  %v35 = vld [vmem:[%s0] sm:$0xff]
  %v36 = vld [vmem:[%s0 + $0x8] sm:$0xff]
  %v37 = vld [vmem:[%s0 + $0x10] sm:$0xff]
  %v38 = vld [vmem:[%s0 + $0x18] sm:$0xff]
  %v39 = vld [vmem:[%s0 + $0x20] sm:$0xff]
  %v40 = vld [vmem:[%s0 + $0x28] sm:$0xff]
  %v41 = vld [vmem:[%s0 + $0x30] sm:$0xff]
  %v42 = vld [vmem:[%s0 + $0x38] sm:$0xff]
  %v43 = vld [vmem:[%s0 + $0x40] sm:$0xff]
  %v44 = vld [vmem:[%s0 + $0x48] sm:$0xff]
  %v45 = vld [vmem:[%s0 + $0x50] sm:$0xff]
  %v46 = vld [vmem:[%s0 + $0x58] sm:$0xff]
  %v47 = vld [vmem:[%s0 + $0x60] sm:$0xff]
  %v48 = vld [vmem:[%s0 + $0x68] sm:$0xff]
  %v49 = vld [vmem:[%s0 + $0x70] sm:$0xff]
  %v50 = vld [vmem:[%s0 + $0x78] sm:$0xff]
  %v51 = vld [vmem:[%s0 + $0x80] sm:$0xff]
  %v52 = vld [vmem:[%s0 + $0x88] sm:$0xff]
  %v53 = vld [vmem:[%s0 + $0x90] sm:$0xff]
  %v54 = vld [vmem:[%s0 + $0x98] sm:$0xff]
  %v55 = vld [vmem:[%s0 + $0xa0] sm:$0xff]
  %v56 = vld [vmem:[%s0 + $0xa8] sm:$0xff]
  %v57 = vld [vmem:[%s0 + $0xb0] sm:$0xff]
  %v58 = vld [vmem:[%s0 + $0xb8] sm:$0xff]
  %v59 = vld [vmem:[%s0 + $0xc0] sm:$0xff]
  %v60 = vld [vmem:[%s0 + $0xc8] sm:$0xff]
  %v61 = vld [vmem:[%s0 + $0xd0] sm:$0xff]
  %v62 = vld [vmem:[%s0 + $0xd8] sm:$0xff]
  %v63 = vld [vmem:[%s0 + $0xe0] sm:$0xff]
  %v64 = vld [vmem:[%s0 + $0xe8] sm:$0xff]
  %v65 = vld [vmem:[%s0 + $0xf0] sm:$0xff]
  %v66 = vld [vmem:[%s0 + $0xf8] sm:$0xff]
  %v67 = vld [vmem:[%s0 + $0x100] sm:$0xff]
  %v68 = vld [vmem:[%s0 + $0x108] sm:$0xff]
  %v69 = vld [vmem:[%s0 + $0x110] sm:$0xff]
  %v70 = vld [vmem:[%s0 + $0x118] sm:$0xff]
  %v71 = vld [vmem:[%s0 + $0x120] sm:$0xff]
  %v72 = vld [vmem:[%s0 + $0x128] sm:$0xff]
  %v73 = vld [vmem:[%s0 + $0x130] sm:$0xff]
  %v74 = vld [vmem:[%s0 + $0x138] sm:$0xff]
  %v75 = vld [vmem:[%s0 + $0x140] sm:$0xff]
  %v76 = vld [vmem:[%s0 + $0x148] sm:$0xff]
  %v77 = vld [vmem:[%s0 + $0x150] sm:$0xff]
  %v78 = vld [vmem:[%s0 + $0x158] sm:$0xff]
  %v79 = vld [vmem:[%s0 + $0x160] sm:$0xff]
  %v80 = vld [vmem:[%s0 + $0x168] sm:$0xff]
  %v81 = vld [vmem:[%s0 + $0x170] sm:$0xff]
  %v82 = vld [vmem:[%s0 + $0x178] sm:$0xff]
  %v83 = vld [vmem:[%s0 + $0x180] sm:$0xff]
  %v84 = vpack.c.bf16 %v36, %v35
  %v85 = vpack.c.bf16 %v38, %v37
  %v86 = vpack.c.bf16 %v40, %v39
  %v87 = vpack.c.bf16 %v42, %v41
  %v88 = vpack.c.bf16 %v44, %v43
  %v89 = vpack.c.bf16 %v46, %v45
  %v90 = vpack.c.bf16 %v48, %v47
  %v91 = vpack.c.bf16 %v50, %v49
  %v92 = vpack.c.bf16 %v52, %v51
  %v93 = vpack.c.bf16 %v54, %v53
  %v94 = vpack.c.bf16 %v56, %v55
  %v95 = vpack.c.bf16 %v58, %v57
  %v96 = vpack.c.bf16 %v60, %v59
  %v97 = vpack.c.bf16 %v62, %v61
  %v98 = vpack.c.bf16 %v64, %v63
  %v99 = vpack.c.bf16 %v66, %v65
  %v100 = vpack.c.bf16 %v68, %v67
  %v101 = vpack.c.bf16 %v70, %v69
  %v102 = vpack.c.bf16 %v72, %v71
  %v103 = vpack.c.bf16 %v74, %v73
  %v104 = vpack.c.bf16 %v76, %v75
  %v105 = vpack.c.bf16 %v78, %v77
  %v106 = vpack.c.bf16 %v80, %v79
  %v107 = vpack.c.bf16 %v82, %v81
  %v108 = vpack.c.bf16 %v83, %v83
  %v110 = vlaneseq
  %v111 = vshrl.u32 %v110, 7
  %v112 = vsub.s32 0, %v111
  %v113 = vrot.slane %v34, %v112
  %v125 = vunpack.c.l.b16 %v24
  %v126 = vunpack.c.l.b16 %v25
  %v127 = vunpack.c.l.b16 %v26
  %v128 = vunpack.c.l.b16 %v27
  %v129 = vunpack.c.l.b16 %v28
  %v130 = vunpack.c.l.b16 %v29
  %v131 = vunpack.c.l.b16 %v30
  %v132 = vunpack.c.l.b16 %v31
  %v133 = vunpack.c.l.b16 %v32
  %v134 = vunpack.c.l.b16 %v33
  %v135 = vpack.c.b16 %v126, %v125
  %v136 = vpack.c.b16 %v128, %v127
  %v137 = vpack.c.b16 %v130, %v129
  %v138 = vpack.c.b16 %v132, %v131
  %v139 = vpack.c.b16 %v134, %v133
  %vm144 = vcmask 613376
  %v146 = vsel %vm144, %v84, 0
  %v149 = vsel %vm144, %v85, 0
  %v152 = vsel %vm144, %v86, 0
  %v155 = vsel %vm144, %v87, 0
  %v158 = vsel %vm144, %v88, 0
  %v161 = vsel %vm144, %v89, 0
  %v164 = vsel %vm144, %v90, 0
  %v167 = vsel %vm144, %v91, 0
  %v170 = vsel %vm144, %v92, 0
  %v173 = vsel %vm144, %v93, 0
  %v176 = vsel %vm144, %v94, 0
  %v179 = vsel %vm144, %v95, 0
  %v182 = vsel %vm144, %v96, 0
  %v185 = vsel %vm144, %v97, 0
  %v188 = vsel %vm144, %v98, 0
  %v191 = vsel %vm144, %v99, 0
  %v194 = vsel %vm144, %v100, 0
  %v197 = vsel %vm144, %v101, 0
  %v200 = vsel %vm144, %v102, 0
  %v203 = vsel %vm144, %v103, 0
  %v206 = vsel %vm144, %v104, 0
  %v209 = vsel %vm144, %v105, 0
  %v212 = vsel %vm144, %v106, 0
  %v215 = vsel %vm144, %v107, 0
  %v218 = vsel %vm144, %v108, 0
  %vm220 = vcmask 1044480
  %vm221 = vcmask 1045504
  %v222 = vsel %vm220, 4294967295, 65535
  %v223 = vsel %vm221, %v222, 0
  %v225 = vand.u32 %v139, %v223
  %227 = vmatprep.subr.bf16.mxu0 0
  %228 = vmatpush1.bf16.msra.mxu0 0
  %229 = vmatprep.subr.bf16.mxu0 0
  %230 = vmatpush1.bf16.msra.mxu0 0
  %231 = vmatprep.subr.bf16.mxu0 0
  %232 = vmatpush1.bf16.msra.mxu0 0
  %233 = vmatprep.subr.bf16.mxu0 0
  %234 = vmatpush1.bf16.msra.mxu0 %v225
  %235 = vmatprep.subr.bf16.mxu0 0
  %236 = vmatpush1.bf16.msra.mxu0 %v138
  %237 = vmatprep.subr.bf16.mxu0 0
  %238 = vmatpush1.bf16.msra.mxu0 %v137
  %239 = vmatprep.subr.bf16.mxu0 0
  %240 = vmatpush1.bf16.msra.mxu0 %v136
  %241 = vmatprep.subr.bf16.mxu0 0
  %242 = vmatpush1.bf16.msra.mxu0 %v135
  %243 = vmatprep.subr.bf16.mxu0 0
  %244 = vmatpush2.bf16.msra.mxu0 0
  %245 = vmatprep.subr.bf16.mxu0 0
  %246 = vmatpush2.bf16.msra.mxu0 0
  %247 = vmatprep.subr.bf16.mxu0 0
  %248 = vmatpush2.bf16.msra.mxu0 0
  %249 = vmatprep.subr.bf16.mxu0 0
  %250 = vmatpush2.bf16.msra.mxu0 0
  %251 = vmatprep.subr.bf16.mxu0 0
  %252 = vmatpush2.bf16.msra.mxu0 0
  %253 = vmatprep.subr.bf16.mxu0 0
  %254 = vmatpush2.bf16.msra.mxu0 0
  %255 = vmatprep.subr.bf16.mxu0 0
  %256 = vmatpush2.bf16.msra.mxu0 0
  %257 = vmatprep.subr.bf16.mxu0 0
  %258 = vmatpush2.bf16.msra.mxu0 0
  %259 = vmatprep.mubr.bf16.mxu0 0
  %260 = vmatmul.mubr.bf16.gmra.mxu0 %v146
  %v261 = vpop.f32.mrf.mxu0
  %v262 = vadd.f32 %v113, %v261
  %v263 = vpop.f32.mrf.mxu0
  %v264 = vpop.f32.mrf.mxu0
  %v265 = vadd.f32 %v113, %v264
  %v266 = vpop.f32.mrf.mxu0
  %267 = vmatprep.mubr.bf16.mxu0 0
  %268 = vmatmul.mubr.bf16.gmra.mxu0 %v149
  %v269 = vpop.f32.mrf.mxu0
  %v270 = vadd.f32 %v113, %v269
  %v271 = vpop.f32.mrf.mxu0
  %v272 = vpop.f32.mrf.mxu0
  %v273 = vadd.f32 %v113, %v272
  %v274 = vpop.f32.mrf.mxu0
  %275 = vmatprep.mubr.bf16.mxu0 0
  %276 = vmatmul.mubr.bf16.gmra.mxu0 %v152
  %v277 = vpop.f32.mrf.mxu0
  %v278 = vadd.f32 %v113, %v277
  %v279 = vpop.f32.mrf.mxu0
  %v280 = vpop.f32.mrf.mxu0
  %v281 = vadd.f32 %v113, %v280
  %v282 = vpop.f32.mrf.mxu0
  %283 = vmatprep.mubr.bf16.mxu0 0
  %284 = vmatmul.mubr.bf16.gmra.mxu0 %v155
  %v285 = vpop.f32.mrf.mxu0
  %v286 = vadd.f32 %v113, %v285
  %v287 = vpop.f32.mrf.mxu0
  %v288 = vpop.f32.mrf.mxu0
  %v289 = vadd.f32 %v113, %v288
  %v290 = vpop.f32.mrf.mxu0
  %291 = vmatprep.mubr.bf16.mxu0 0
  %292 = vmatmul.mubr.bf16.gmra.mxu0 %v158
  %v293 = vpop.f32.mrf.mxu0
  %v294 = vadd.f32 %v113, %v293
  %v295 = vpop.f32.mrf.mxu0
  %v296 = vpop.f32.mrf.mxu0
  %v297 = vadd.f32 %v113, %v296
  %v298 = vpop.f32.mrf.mxu0
  %299 = vmatprep.mubr.bf16.mxu0 0
  %300 = vmatmul.mubr.bf16.gmra.mxu0 %v161
  %v301 = vpop.f32.mrf.mxu0
  %v302 = vadd.f32 %v113, %v301
  %v303 = vpop.f32.mrf.mxu0
  %v304 = vpop.f32.mrf.mxu0
  %v305 = vadd.f32 %v113, %v304
  %v306 = vpop.f32.mrf.mxu0
  %307 = vmatprep.mubr.bf16.mxu0 0
  %308 = vmatmul.mubr.bf16.gmra.mxu0 %v164
  %v309 = vpop.f32.mrf.mxu0
  %v310 = vadd.f32 %v113, %v309
  %v311 = vpop.f32.mrf.mxu0
  %v312 = vpop.f32.mrf.mxu0
  %v313 = vadd.f32 %v113, %v312
  %v314 = vpop.f32.mrf.mxu0
  %315 = vmatprep.mubr.bf16.mxu0 0
  %316 = vmatmul.mubr.bf16.gmra.mxu0 %v167
  %v317 = vpop.f32.mrf.mxu0
  %v318 = vadd.f32 %v113, %v317
  %v319 = vpop.f32.mrf.mxu0
  %v320 = vpop.f32.mrf.mxu0
  %v321 = vadd.f32 %v113, %v320
  %v322 = vpop.f32.mrf.mxu0
  %323 = vmatprep.mubr.bf16.mxu0 0
  %324 = vmatmul.mubr.bf16.gmra.mxu0 %v170
  %v325 = vpop.f32.mrf.mxu0
  %v326 = vadd.f32 %v113, %v325
  %v327 = vpop.f32.mrf.mxu0
  %v328 = vpop.f32.mrf.mxu0
  %v329 = vadd.f32 %v113, %v328
  %v330 = vpop.f32.mrf.mxu0
  %331 = vmatprep.mubr.bf16.mxu0 0
  %332 = vmatmul.mubr.bf16.gmra.mxu0 %v173
  %v333 = vpop.f32.mrf.mxu0
  %v334 = vadd.f32 %v113, %v333
  %v335 = vpop.f32.mrf.mxu0
  %v336 = vpop.f32.mrf.mxu0
  %v337 = vadd.f32 %v113, %v336
  %v338 = vpop.f32.mrf.mxu0
  %339 = vmatprep.mubr.bf16.mxu0 0
  %340 = vmatmul.mubr.bf16.gmra.mxu0 %v176
  %v341 = vpop.f32.mrf.mxu0
  %v342 = vadd.f32 %v113, %v341
  %v343 = vpop.f32.mrf.mxu0
  %v344 = vpop.f32.mrf.mxu0
  %v345 = vadd.f32 %v113, %v344
  %v346 = vpop.f32.mrf.mxu0
  %347 = vmatprep.mubr.bf16.mxu0 0
  %348 = vmatmul.mubr.bf16.gmra.mxu0 %v179
  %v349 = vpop.f32.mrf.mxu0
  %v350 = vadd.f32 %v113, %v349
  %v351 = vpop.f32.mrf.mxu0
  %v352 = vpop.f32.mrf.mxu0
  %v353 = vadd.f32 %v113, %v352
  %v354 = vpop.f32.mrf.mxu0
  %355 = vmatprep.mubr.bf16.mxu0 0
  %356 = vmatmul.mubr.bf16.gmra.mxu0 %v182
  %v357 = vpop.f32.mrf.mxu0
  %v358 = vadd.f32 %v113, %v357
  %v359 = vpop.f32.mrf.mxu0
  %v360 = vpop.f32.mrf.mxu0
  %v361 = vadd.f32 %v113, %v360
  %v362 = vpop.f32.mrf.mxu0
  %363 = vmatprep.mubr.bf16.mxu0 0
  %364 = vmatmul.mubr.bf16.gmra.mxu0 %v185
  %v365 = vpop.f32.mrf.mxu0
  %v366 = vadd.f32 %v113, %v365
  %v367 = vpop.f32.mrf.mxu0
  %v368 = vpop.f32.mrf.mxu0
  %v369 = vadd.f32 %v113, %v368
  %v370 = vpop.f32.mrf.mxu0
  %371 = vmatprep.mubr.bf16.mxu0 0
  %372 = vmatmul.mubr.bf16.gmra.mxu0 %v188
  %v373 = vpop.f32.mrf.mxu0
  %v374 = vadd.f32 %v113, %v373
  %v375 = vpop.f32.mrf.mxu0
  %v376 = vpop.f32.mrf.mxu0
  %v377 = vadd.f32 %v113, %v376
  %v378 = vpop.f32.mrf.mxu0
  %379 = vmatprep.mubr.bf16.mxu0 0
  %380 = vmatmul.mubr.bf16.gmra.mxu0 %v191
  %v381 = vpop.f32.mrf.mxu0
  %v382 = vadd.f32 %v113, %v381
  %v383 = vpop.f32.mrf.mxu0
  %v384 = vpop.f32.mrf.mxu0
  %v385 = vadd.f32 %v113, %v384
  %v386 = vpop.f32.mrf.mxu0
  %387 = vmatprep.mubr.bf16.mxu0 0
  %388 = vmatmul.mubr.bf16.gmra.mxu0 %v194
  %v389 = vpop.f32.mrf.mxu0
  %v390 = vadd.f32 %v113, %v389
  %v391 = vpop.f32.mrf.mxu0
  %v392 = vpop.f32.mrf.mxu0
  %v393 = vadd.f32 %v113, %v392
  %v394 = vpop.f32.mrf.mxu0
  %395 = vmatprep.mubr.bf16.mxu0 0
  %396 = vmatmul.mubr.bf16.gmra.mxu0 %v197
  %v397 = vpop.f32.mrf.mxu0
  %v398 = vadd.f32 %v113, %v397
  %v399 = vpop.f32.mrf.mxu0
  %v400 = vpop.f32.mrf.mxu0
  %v401 = vadd.f32 %v113, %v400
  %v402 = vpop.f32.mrf.mxu0
  %403 = vmatprep.mubr.bf16.mxu0 0
  %404 = vmatmul.mubr.bf16.gmra.mxu0 %v200
  %v405 = vpop.f32.mrf.mxu0
  %v406 = vadd.f32 %v113, %v405
  %v407 = vpop.f32.mrf.mxu0
  %v408 = vpop.f32.mrf.mxu0
  %v409 = vadd.f32 %v113, %v408
  %v410 = vpop.f32.mrf.mxu0
  %411 = vmatprep.mubr.bf16.mxu0 0
  %412 = vmatmul.mubr.bf16.gmra.mxu0 %v203
  %v413 = vpop.f32.mrf.mxu0
  %v414 = vadd.f32 %v113, %v413
  %v415 = vpop.f32.mrf.mxu0
  %v416 = vpop.f32.mrf.mxu0
  %v417 = vadd.f32 %v113, %v416
  %v418 = vpop.f32.mrf.mxu0
  %419 = vmatprep.mubr.bf16.mxu0 0
  %420 = vmatmul.mubr.bf16.gmra.mxu0 %v206
  %v421 = vpop.f32.mrf.mxu0
  %v422 = vadd.f32 %v113, %v421
  %v423 = vpop.f32.mrf.mxu0
  %v424 = vpop.f32.mrf.mxu0
  %v425 = vadd.f32 %v113, %v424
  %v426 = vpop.f32.mrf.mxu0
  %427 = vmatprep.mubr.bf16.mxu0 0
  %428 = vmatmul.mubr.bf16.gmra.mxu0 %v209
  %v429 = vpop.f32.mrf.mxu0
  %v430 = vadd.f32 %v113, %v429
  %v431 = vpop.f32.mrf.mxu0
  %v432 = vpop.f32.mrf.mxu0
  %v433 = vadd.f32 %v113, %v432
  %v434 = vpop.f32.mrf.mxu0
  %435 = vmatprep.mubr.bf16.mxu0 0
  %436 = vmatmul.mubr.bf16.gmra.mxu0 %v212
  %v437 = vpop.f32.mrf.mxu0
  %v438 = vadd.f32 %v113, %v437
  %v439 = vpop.f32.mrf.mxu0
  %v440 = vpop.f32.mrf.mxu0
  %v441 = vadd.f32 %v113, %v440
  %v442 = vpop.f32.mrf.mxu0
  %443 = vmatprep.mubr.bf16.mxu0 0
  %444 = vmatmul.mubr.bf16.gmra.mxu0 %v215
  %v445 = vpop.f32.mrf.mxu0
  %v446 = vadd.f32 %v113, %v445
  %v447 = vpop.f32.mrf.mxu0
  %v448 = vpop.f32.mrf.mxu0
  %v449 = vadd.f32 %v113, %v448
  %v450 = vpop.f32.mrf.mxu0
  %451 = vmatprep.mubr.bf16.mxu0 0
  %452 = vmatmul.mubr.bf16.gmra.mxu0 %v218
  %v453 = vpop.f32.mrf.mxu0
  %v454 = vadd.f32 %v113, %v453
  %v455 = vpop.f32.mrf.mxu0
  %v456 = vpop.f32.mrf.mxu0
  %v457 = vpop.f32.mrf.mxu0
  %458 = vdwg.mxu0
  %v459 = vld [vmem:[%s1] sm:$0xff]
  %v460 = vld [vmem:[%s1 + $0x8] sm:$0xff]
  %v461 = vld [vmem:[%s1 + $0x10] sm:$0xff]
  %v462 = vld [vmem:[%s1 + $0x18] sm:$0xff]
  %v463 = vld [vmem:[%s1 + $0x20] sm:$0xff]
  %v464 = vld [vmem:[%s1 + $0x28] sm:$0xff]
  %v465 = vld [vmem:[%s1 + $0x30] sm:$0xff]
  %v466 = vld [vmem:[%s1 + $0x38] sm:$0xff]
  %v467 = vld [vmem:[%s1 + $0x40] sm:$0xff]
  %v468 = vld [vmem:[%s1 + $0x48] sm:$0xff]
  %v469 = vld [vmem:[%s1 + $0x50] sm:$0xff]
  %v470 = vld [vmem:[%s1 + $0x58] sm:$0xff]
  %v471 = vld [vmem:[%s1 + $0x60] sm:$0xff]
  %v472 = vld [vmem:[%s1 + $0x68] sm:$0xff]
  %v473 = vld [vmem:[%s1 + $0x70] sm:$0xff]
  %v474 = vld [vmem:[%s1 + $0x78] sm:$0xff]
  %v475 = vld [vmem:[%s1 + $0x80] sm:$0xff]
  %v476 = vld [vmem:[%s1 + $0x88] sm:$0xff]
  %v477 = vld [vmem:[%s1 + $0x90] sm:$0xff]
  %v478 = vld [vmem:[%s1 + $0x98] sm:$0xff]
  %v479 = vld [vmem:[%s1 + $0xa0] sm:$0xff]
  %v480 = vld [vmem:[%s1 + $0xa8] sm:$0xff]
  %v481 = vld [vmem:[%s1 + $0xb0] sm:$0xff]
  %v482 = vld [vmem:[%s1 + $0xb8] sm:$0xff]
  %v483 = vld [vmem:[%s1 + $0xc0] sm:$0xff]
  %v484 = vld [vmem:[%s1 + $0xc8] sm:$0xff]
  %v485 = vld [vmem:[%s1 + $0xd0] sm:$0xff]
  %v486 = vld [vmem:[%s1 + $0xd8] sm:$0xff]
  %v487 = vld [vmem:[%s1 + $0xe0] sm:$0xff]
  %v488 = vld [vmem:[%s1 + $0xe8] sm:$0xff]
  %v489 = vld [vmem:[%s1 + $0xf0] sm:$0xff]
  %v490 = vld [vmem:[%s1 + $0xf8] sm:$0xff]
  %v491 = vld [vmem:[%s1 + $0x100] sm:$0xff]
  %v492 = vld [vmem:[%s1 + $0x108] sm:$0xff]
  %v493 = vld [vmem:[%s1 + $0x110] sm:$0xff]
  %v494 = vld [vmem:[%s1 + $0x118] sm:$0xff]
  %v495 = vld [vmem:[%s1 + $0x120] sm:$0xff]
  %v496 = vld [vmem:[%s1 + $0x128] sm:$0xff]
  %v497 = vld [vmem:[%s1 + $0x130] sm:$0xff]
  %v498 = vld [vmem:[%s1 + $0x138] sm:$0xff]
  %v499 = vld [vmem:[%s1 + $0x140] sm:$0xff]
  %v500 = vld [vmem:[%s1 + $0x148] sm:$0xff]
  %v501 = vld [vmem:[%s1 + $0x150] sm:$0xff]
  %v502 = vld [vmem:[%s1 + $0x158] sm:$0xff]
  %v503 = vld [vmem:[%s1 + $0x160] sm:$0xff]
  %v504 = vld [vmem:[%s1 + $0x168] sm:$0xff]
  %v505 = vld [vmem:[%s1 + $0x170] sm:$0xff]
  %v506 = vld [vmem:[%s1 + $0x178] sm:$0xff]
  %v507 = vld [vmem:[%s1 + $0x180] sm:$0xff]
  %v508 = vpack.c.bf16 %v460, %v459
  %v509 = vpack.c.bf16 %v462, %v461
  %v510 = vpack.c.bf16 %v464, %v463
  %v511 = vpack.c.bf16 %v466, %v465
  %v512 = vpack.c.bf16 %v468, %v467
  %v513 = vpack.c.bf16 %v470, %v469
  %v514 = vpack.c.bf16 %v472, %v471
  %v515 = vpack.c.bf16 %v474, %v473
  %v516 = vpack.c.bf16 %v476, %v475
  %v517 = vpack.c.bf16 %v478, %v477
  %v518 = vpack.c.bf16 %v480, %v479
  %v519 = vpack.c.bf16 %v482, %v481
  %v520 = vpack.c.bf16 %v484, %v483
  %v521 = vpack.c.bf16 %v486, %v485
  %v522 = vpack.c.bf16 %v488, %v487
  %v523 = vpack.c.bf16 %v490, %v489
  %v524 = vpack.c.bf16 %v492, %v491
  %v525 = vpack.c.bf16 %v494, %v493
  %v526 = vpack.c.bf16 %v496, %v495
  %v527 = vpack.c.bf16 %v498, %v497
  %v528 = vpack.c.bf16 %v500, %v499
  %v529 = vpack.c.bf16 %v502, %v501
  %v530 = vpack.c.bf16 %v504, %v503
  %v531 = vpack.c.bf16 %v506, %v505
  %v532 = vpack.c.bf16 %v507, %v507
  %v534 = vsel %vm144, %v508, 0
  %v537 = vsel %vm144, %v509, 0
  %v540 = vsel %vm144, %v510, 0
  %v543 = vsel %vm144, %v511, 0
  %v546 = vsel %vm144, %v512, 0
  %v549 = vsel %vm144, %v513, 0
  %v552 = vsel %vm144, %v514, 0
  %v555 = vsel %vm144, %v515, 0
  %v558 = vsel %vm144, %v516, 0
  %v561 = vsel %vm144, %v517, 0
  %v564 = vsel %vm144, %v518, 0
  %v567 = vsel %vm144, %v519, 0
  %v570 = vsel %vm144, %v520, 0
  %v573 = vsel %vm144, %v521, 0
  %v576 = vsel %vm144, %v522, 0
  %v579 = vsel %vm144, %v523, 0
  %v582 = vsel %vm144, %v524, 0
  %v585 = vsel %vm144, %v525, 0
  %v588 = vsel %vm144, %v526, 0
  %v591 = vsel %vm144, %v527, 0
  %v594 = vsel %vm144, %v528, 0
  %v597 = vsel %vm144, %v529, 0
  %v600 = vsel %vm144, %v530, 0
  %v603 = vsel %vm144, %v531, 0
  %v606 = vsel %vm144, %v532, 0
  %608 = vmatprep.subr.bf16.mxu0 0
  %609 = vmatpush1.bf16.msra.mxu0 0
  %610 = vmatprep.subr.bf16.mxu0 0
  %611 = vmatpush1.bf16.msra.mxu0 0
  %612 = vmatprep.subr.bf16.mxu0 0
  %613 = vmatpush1.bf16.msra.mxu0 0
  %614 = vmatprep.subr.bf16.mxu0 0
  %615 = vmatpush1.bf16.msra.mxu0 %v225
  %616 = vmatprep.subr.bf16.mxu0 0
  %617 = vmatpush1.bf16.msra.mxu0 %v138
  %618 = vmatprep.subr.bf16.mxu0 0
  %619 = vmatpush1.bf16.msra.mxu0 %v137
  %620 = vmatprep.subr.bf16.mxu0 0
  %621 = vmatpush1.bf16.msra.mxu0 %v136
  %622 = vmatprep.subr.bf16.mxu0 0
  %623 = vmatpush1.bf16.msra.mxu0 %v135
  %624 = vmatprep.subr.bf16.mxu0 0
  %625 = vmatpush2.bf16.msra.mxu0 0
  %626 = vmatprep.subr.bf16.mxu0 0
  %627 = vmatpush2.bf16.msra.mxu0 0
  %628 = vmatprep.subr.bf16.mxu0 0
  %629 = vmatpush2.bf16.msra.mxu0 0
  %630 = vmatprep.subr.bf16.mxu0 0
  %631 = vmatpush2.bf16.msra.mxu0 0
  %632 = vmatprep.subr.bf16.mxu0 0
  %633 = vmatpush2.bf16.msra.mxu0 0
  %634 = vmatprep.subr.bf16.mxu0 0
  %635 = vmatpush2.bf16.msra.mxu0 0
  %636 = vmatprep.subr.bf16.mxu0 0
  %637 = vmatpush2.bf16.msra.mxu0 0
  %638 = vmatprep.subr.bf16.mxu0 0
  %639 = vmatpush2.bf16.msra.mxu0 0
  %640 = vmatprep.mubr.bf16.mxu0 0
  %641 = vmatmul.mubr.bf16.gmra.mxu0 %v534
  %v642 = vpop.f32.mrf.mxu0
  %v643 = vadd.f32 %v113, %v642
  %v644 = vpop.f32.mrf.mxu0
  %v645 = vpop.f32.mrf.mxu0
  %v646 = vadd.f32 %v113, %v645
  %v647 = vpop.f32.mrf.mxu0
  %648 = vmatprep.mubr.bf16.mxu0 0
  %649 = vmatmul.mubr.bf16.gmra.mxu0 %v537
  %v650 = vpop.f32.mrf.mxu0
  %v651 = vadd.f32 %v113, %v650
  %v652 = vpop.f32.mrf.mxu0
  %v653 = vpop.f32.mrf.mxu0
  %v654 = vadd.f32 %v113, %v653
  %v655 = vpop.f32.mrf.mxu0
  %656 = vmatprep.mubr.bf16.mxu0 0
  %657 = vmatmul.mubr.bf16.gmra.mxu0 %v540
  %v658 = vpop.f32.mrf.mxu0
  %v659 = vadd.f32 %v113, %v658
  %v660 = vpop.f32.mrf.mxu0
  %v661 = vpop.f32.mrf.mxu0
  %v662 = vadd.f32 %v113, %v661
  %v663 = vpop.f32.mrf.mxu0
  %664 = vmatprep.mubr.bf16.mxu0 0
  %665 = vmatmul.mubr.bf16.gmra.mxu0 %v543
  %v666 = vpop.f32.mrf.mxu0
  %v667 = vadd.f32 %v113, %v666
  %v668 = vpop.f32.mrf.mxu0
  %v669 = vpop.f32.mrf.mxu0
  %v670 = vadd.f32 %v113, %v669
  %v671 = vpop.f32.mrf.mxu0
  %672 = vmatprep.mubr.bf16.mxu0 0
  %673 = vmatmul.mubr.bf16.gmra.mxu0 %v546
  %v674 = vpop.f32.mrf.mxu0
  %v675 = vadd.f32 %v113, %v674
  %v676 = vpop.f32.mrf.mxu0
  %v677 = vpop.f32.mrf.mxu0
  %v678 = vadd.f32 %v113, %v677
  %v679 = vpop.f32.mrf.mxu0
  %680 = vmatprep.mubr.bf16.mxu0 0
  %681 = vmatmul.mubr.bf16.gmra.mxu0 %v549
  %v682 = vpop.f32.mrf.mxu0
  %v683 = vadd.f32 %v113, %v682
  %v684 = vpop.f32.mrf.mxu0
  %v685 = vpop.f32.mrf.mxu0
  %v686 = vadd.f32 %v113, %v685
  %v687 = vpop.f32.mrf.mxu0
  %688 = vmatprep.mubr.bf16.mxu0 0
  %689 = vmatmul.mubr.bf16.gmra.mxu0 %v552
  %v690 = vpop.f32.mrf.mxu0
  %v691 = vadd.f32 %v113, %v690
  %v692 = vpop.f32.mrf.mxu0
  %v693 = vpop.f32.mrf.mxu0
  %v694 = vadd.f32 %v113, %v693
  %v695 = vpop.f32.mrf.mxu0
  %696 = vmatprep.mubr.bf16.mxu0 0
  %697 = vmatmul.mubr.bf16.gmra.mxu0 %v555
  %v698 = vpop.f32.mrf.mxu0
  %v699 = vadd.f32 %v113, %v698
  %v700 = vpop.f32.mrf.mxu0
  %v701 = vpop.f32.mrf.mxu0
  %v702 = vadd.f32 %v113, %v701
  %v703 = vpop.f32.mrf.mxu0
  %704 = vmatprep.mubr.bf16.mxu0 0
  %705 = vmatmul.mubr.bf16.gmra.mxu0 %v558
  %v706 = vpop.f32.mrf.mxu0
  %v707 = vadd.f32 %v113, %v706
  %v708 = vpop.f32.mrf.mxu0
  %v709 = vpop.f32.mrf.mxu0
  %v710 = vadd.f32 %v113, %v709
  %v711 = vpop.f32.mrf.mxu0
  %712 = vmatprep.mubr.bf16.mxu0 0
  %713 = vmatmul.mubr.bf16.gmra.mxu0 %v561
  %v714 = vpop.f32.mrf.mxu0
  %v715 = vadd.f32 %v113, %v714
  %v716 = vpop.f32.mrf.mxu0
  %v717 = vpop.f32.mrf.mxu0
  %v718 = vadd.f32 %v113, %v717
  %v719 = vpop.f32.mrf.mxu0
  %720 = vmatprep.mubr.bf16.mxu0 0
  %721 = vmatmul.mubr.bf16.gmra.mxu0 %v564
  %v722 = vpop.f32.mrf.mxu0
  %v723 = vadd.f32 %v113, %v722
  %v724 = vpop.f32.mrf.mxu0
  %v725 = vpop.f32.mrf.mxu0
  %v726 = vadd.f32 %v113, %v725
  %v727 = vpop.f32.mrf.mxu0
  %728 = vmatprep.mubr.bf16.mxu0 0
  %729 = vmatmul.mubr.bf16.gmra.mxu0 %v567
  %v730 = vpop.f32.mrf.mxu0
  %v731 = vadd.f32 %v113, %v730
  %v732 = vpop.f32.mrf.mxu0
  %v733 = vpop.f32.mrf.mxu0
  %v734 = vadd.f32 %v113, %v733
  %v735 = vpop.f32.mrf.mxu0
  %736 = vmatprep.mubr.bf16.mxu0 0
  %737 = vmatmul.mubr.bf16.gmra.mxu0 %v570
  %v738 = vpop.f32.mrf.mxu0
  %v739 = vadd.f32 %v113, %v738
  %v740 = vpop.f32.mrf.mxu0
  %v741 = vpop.f32.mrf.mxu0
  %v742 = vadd.f32 %v113, %v741
  %v743 = vpop.f32.mrf.mxu0
  %744 = vmatprep.mubr.bf16.mxu0 0
  %745 = vmatmul.mubr.bf16.gmra.mxu0 %v573
  %v746 = vpop.f32.mrf.mxu0
  %v747 = vadd.f32 %v113, %v746
  %v748 = vpop.f32.mrf.mxu0
  %v749 = vpop.f32.mrf.mxu0
  %v750 = vadd.f32 %v113, %v749
  %v751 = vpop.f32.mrf.mxu0
  %752 = vmatprep.mubr.bf16.mxu0 0
  %753 = vmatmul.mubr.bf16.gmra.mxu0 %v576
  %v754 = vpop.f32.mrf.mxu0
  %v755 = vadd.f32 %v113, %v754
  %v756 = vpop.f32.mrf.mxu0
  %v757 = vpop.f32.mrf.mxu0
  %v758 = vadd.f32 %v113, %v757
  %v759 = vpop.f32.mrf.mxu0
  %760 = vmatprep.mubr.bf16.mxu0 0
  %761 = vmatmul.mubr.bf16.gmra.mxu0 %v579
  %v762 = vpop.f32.mrf.mxu0
  %v763 = vadd.f32 %v113, %v762
  %v764 = vpop.f32.mrf.mxu0
  %v765 = vpop.f32.mrf.mxu0
  %v766 = vadd.f32 %v113, %v765
  %v767 = vpop.f32.mrf.mxu0
  %768 = vmatprep.mubr.bf16.mxu0 0
  %769 = vmatmul.mubr.bf16.gmra.mxu0 %v582
  %v770 = vpop.f32.mrf.mxu0
  %v771 = vadd.f32 %v113, %v770
  %v772 = vpop.f32.mrf.mxu0
  %v773 = vpop.f32.mrf.mxu0
  %v774 = vadd.f32 %v113, %v773
  %v775 = vpop.f32.mrf.mxu0
  %776 = vmatprep.mubr.bf16.mxu0 0
  %777 = vmatmul.mubr.bf16.gmra.mxu0 %v585
  %v778 = vpop.f32.mrf.mxu0
  %v779 = vadd.f32 %v113, %v778
  %v780 = vpop.f32.mrf.mxu0
  %v781 = vpop.f32.mrf.mxu0
  %v782 = vadd.f32 %v113, %v781
  %v783 = vpop.f32.mrf.mxu0
  %784 = vmatprep.mubr.bf16.mxu0 0
  %785 = vmatmul.mubr.bf16.gmra.mxu0 %v588
  %v786 = vpop.f32.mrf.mxu0
  %v787 = vadd.f32 %v113, %v786
  %v788 = vpop.f32.mrf.mxu0
  %v789 = vpop.f32.mrf.mxu0
  %v790 = vadd.f32 %v113, %v789
  %v791 = vpop.f32.mrf.mxu0
  %792 = vmatprep.mubr.bf16.mxu0 0
  %793 = vmatmul.mubr.bf16.gmra.mxu0 %v591
  %v794 = vpop.f32.mrf.mxu0
  %v795 = vadd.f32 %v113, %v794
  %v796 = vpop.f32.mrf.mxu0
  %v797 = vpop.f32.mrf.mxu0
  %v798 = vadd.f32 %v113, %v797
  %v799 = vpop.f32.mrf.mxu0
  %800 = vmatprep.mubr.bf16.mxu0 0
  %801 = vmatmul.mubr.bf16.gmra.mxu0 %v594
  %v802 = vpop.f32.mrf.mxu0
  %v803 = vadd.f32 %v113, %v802
  %v804 = vpop.f32.mrf.mxu0
  %v805 = vpop.f32.mrf.mxu0
  %v806 = vadd.f32 %v113, %v805
  %v807 = vpop.f32.mrf.mxu0
  %808 = vmatprep.mubr.bf16.mxu0 0
  %809 = vmatmul.mubr.bf16.gmra.mxu0 %v597
  %v810 = vpop.f32.mrf.mxu0
  %v811 = vadd.f32 %v113, %v810
  %v812 = vpop.f32.mrf.mxu0
  %v813 = vpop.f32.mrf.mxu0
  %v814 = vadd.f32 %v113, %v813
  %v815 = vpop.f32.mrf.mxu0
  %816 = vmatprep.mubr.bf16.mxu0 0
  %817 = vmatmul.mubr.bf16.gmra.mxu0 %v600
  %v818 = vpop.f32.mrf.mxu0
  %v819 = vadd.f32 %v113, %v818
  %v820 = vpop.f32.mrf.mxu0
  %v821 = vpop.f32.mrf.mxu0
  %v822 = vadd.f32 %v113, %v821
  %v823 = vpop.f32.mrf.mxu0
  %824 = vmatprep.mubr.bf16.mxu0 0
  %825 = vmatmul.mubr.bf16.gmra.mxu0 %v603
  %v826 = vpop.f32.mrf.mxu0
  %v827 = vadd.f32 %v113, %v826
  %v828 = vpop.f32.mrf.mxu0
  %v829 = vpop.f32.mrf.mxu0
  %v830 = vadd.f32 %v113, %v829
  %v831 = vpop.f32.mrf.mxu0
  %832 = vmatprep.mubr.bf16.mxu0 0
  %833 = vmatmul.mubr.bf16.gmra.mxu0 %v606
  %v834 = vpop.f32.mrf.mxu0
  %v835 = vadd.f32 %v113, %v834
  %v836 = vpop.f32.mrf.mxu0
  %v837 = vpop.f32.mrf.mxu0
  %v838 = vpop.f32.mrf.mxu0
  %839 = vdwg.mxu0
  %v840 = vmax.f32 %v262, %v643
  %v841 = vmax.f32 %v265, %v646
  %v842 = vmax.f32 %v270, %v651
  %v843 = vmax.f32 %v273, %v654
  %v844 = vmax.f32 %v278, %v659
  %v845 = vmax.f32 %v281, %v662
  %v846 = vmax.f32 %v286, %v667
  %v847 = vmax.f32 %v289, %v670
  %v848 = vmax.f32 %v294, %v675
  %v849 = vmax.f32 %v297, %v678
  %v850 = vmax.f32 %v302, %v683
  %v851 = vmax.f32 %v305, %v686
  %v852 = vmax.f32 %v310, %v691
  %v853 = vmax.f32 %v313, %v694
  %v854 = vmax.f32 %v318, %v699
  %v855 = vmax.f32 %v321, %v702
  %v856 = vmax.f32 %v326, %v707
  %v857 = vmax.f32 %v329, %v710
  %v858 = vmax.f32 %v334, %v715
  %v859 = vmax.f32 %v337, %v718
  %v860 = vmax.f32 %v342, %v723
  %v861 = vmax.f32 %v345, %v726
  %v862 = vmax.f32 %v350, %v731
  %v863 = vmax.f32 %v353, %v734
  %v864 = vmax.f32 %v358, %v739
  %v865 = vmax.f32 %v361, %v742
  %v866 = vmax.f32 %v366, %v747
  %v867 = vmax.f32 %v369, %v750
  %v868 = vmax.f32 %v374, %v755
  %v869 = vmax.f32 %v377, %v758
  %v870 = vmax.f32 %v382, %v763
  %v871 = vmax.f32 %v385, %v766
  %v872 = vmax.f32 %v390, %v771
  %v873 = vmax.f32 %v393, %v774
  %v874 = vmax.f32 %v398, %v779
  %v875 = vmax.f32 %v401, %v782
  %v876 = vmax.f32 %v406, %v787
  %v877 = vmax.f32 %v409, %v790
  %v878 = vmax.f32 %v414, %v795
  %v879 = vmax.f32 %v417, %v798
  %v880 = vmax.f32 %v422, %v803
  %v881 = vmax.f32 %v425, %v806
  %v882 = vmax.f32 %v430, %v811
  %v883 = vmax.f32 %v433, %v814
  %v884 = vmax.f32 %v438, %v819
  %v885 = vmax.f32 %v441, %v822
  %v886 = vmax.f32 %v446, %v827
  %v887 = vmax.f32 %v449, %v830
  %v888 = vmax.f32 %v454, %v835
  %v889 = vld [vmem:[%s2] sm:$0xff]
  %v890 = vld [vmem:[%s2 + $0x8] sm:$0xff]
  %v891 = vld [vmem:[%s2 + $0x10] sm:$0xff]
  %v892 = vld [vmem:[%s2 + $0x18] sm:$0xff]
  %v893 = vld [vmem:[%s2 + $0x20] sm:$0xff]
  %v894 = vld [vmem:[%s2 + $0x28] sm:$0xff]
  %v895 = vld [vmem:[%s2 + $0x30] sm:$0xff]
  %v896 = vld [vmem:[%s2 + $0x38] sm:$0xff]
  %v897 = vld [vmem:[%s2 + $0x40] sm:$0xff]
  %v898 = vld [vmem:[%s2 + $0x48] sm:$0xff]
  %v899 = vld [vmem:[%s2 + $0x50] sm:$0xff]
  %v900 = vld [vmem:[%s2 + $0x58] sm:$0xff]
  %v901 = vld [vmem:[%s2 + $0x60] sm:$0xff]
  %v902 = vld [vmem:[%s2 + $0x68] sm:$0xff]
  %v903 = vld [vmem:[%s2 + $0x70] sm:$0xff]
  %v904 = vld [vmem:[%s2 + $0x78] sm:$0xff]
  %v905 = vld [vmem:[%s2 + $0x80] sm:$0xff]
  %v906 = vld [vmem:[%s2 + $0x88] sm:$0xff]
  %v907 = vld [vmem:[%s2 + $0x90] sm:$0xff]
  %v908 = vld [vmem:[%s2 + $0x98] sm:$0xff]
  %v909 = vld [vmem:[%s2 + $0xa0] sm:$0xff]
  %v910 = vld [vmem:[%s2 + $0xa8] sm:$0xff]
  %v911 = vld [vmem:[%s2 + $0xb0] sm:$0xff]
  %v912 = vld [vmem:[%s2 + $0xb8] sm:$0xff]
  %v913 = vld [vmem:[%s2 + $0xc0] sm:$0xff]
  %v914 = vld [vmem:[%s2 + $0xc8] sm:$0xff]
  %v915 = vld [vmem:[%s2 + $0xd0] sm:$0xff]
  %v916 = vld [vmem:[%s2 + $0xd8] sm:$0xff]
  %v917 = vld [vmem:[%s2 + $0xe0] sm:$0xff]
  %v918 = vld [vmem:[%s2 + $0xe8] sm:$0xff]
  %v919 = vld [vmem:[%s2 + $0xf0] sm:$0xff]
  %v920 = vld [vmem:[%s2 + $0xf8] sm:$0xff]
  %v921 = vld [vmem:[%s2 + $0x100] sm:$0xff]
  %v922 = vld [vmem:[%s2 + $0x108] sm:$0xff]
  %v923 = vld [vmem:[%s2 + $0x110] sm:$0xff]
  %v924 = vld [vmem:[%s2 + $0x118] sm:$0xff]
  %v925 = vld [vmem:[%s2 + $0x120] sm:$0xff]
  %v926 = vld [vmem:[%s2 + $0x128] sm:$0xff]
  %v927 = vld [vmem:[%s2 + $0x130] sm:$0xff]
  %v928 = vld [vmem:[%s2 + $0x138] sm:$0xff]
  %v929 = vld [vmem:[%s2 + $0x140] sm:$0xff]
  %v930 = vld [vmem:[%s2 + $0x148] sm:$0xff]
  %v931 = vld [vmem:[%s2 + $0x150] sm:$0xff]
  %v932 = vld [vmem:[%s2 + $0x158] sm:$0xff]
  %v933 = vld [vmem:[%s2 + $0x160] sm:$0xff]
  %v934 = vld [vmem:[%s2 + $0x168] sm:$0xff]
  %v935 = vld [vmem:[%s2 + $0x170] sm:$0xff]
  %v936 = vld [vmem:[%s2 + $0x178] sm:$0xff]
  %v937 = vld [vmem:[%s2 + $0x180] sm:$0xff]
  %v938 = vpack.c.bf16 %v890, %v889
  %v939 = vpack.c.bf16 %v892, %v891
  %v940 = vpack.c.bf16 %v894, %v893
  %v941 = vpack.c.bf16 %v896, %v895
  %v942 = vpack.c.bf16 %v898, %v897
  %v943 = vpack.c.bf16 %v900, %v899
  %v944 = vpack.c.bf16 %v902, %v901
  %v945 = vpack.c.bf16 %v904, %v903
  %v946 = vpack.c.bf16 %v906, %v905
  %v947 = vpack.c.bf16 %v908, %v907
  %v948 = vpack.c.bf16 %v910, %v909
  %v949 = vpack.c.bf16 %v912, %v911
  %v950 = vpack.c.bf16 %v914, %v913
  %v951 = vpack.c.bf16 %v916, %v915
  %v952 = vpack.c.bf16 %v918, %v917
  %v953 = vpack.c.bf16 %v920, %v919
  %v954 = vpack.c.bf16 %v922, %v921
  %v955 = vpack.c.bf16 %v924, %v923
  %v956 = vpack.c.bf16 %v926, %v925
  %v957 = vpack.c.bf16 %v928, %v927
  %v958 = vpack.c.bf16 %v930, %v929
  %v959 = vpack.c.bf16 %v932, %v931
  %v960 = vpack.c.bf16 %v934, %v933
  %v961 = vpack.c.bf16 %v936, %v935
  %v962 = vpack.c.bf16 %v937, %v937
  %v964 = vsel %vm144, %v938, 0
  %v967 = vsel %vm144, %v939, 0
  %v970 = vsel %vm144, %v940, 0
  %v973 = vsel %vm144, %v941, 0
  %v976 = vsel %vm144, %v942, 0
  %v979 = vsel %vm144, %v943, 0
  %v982 = vsel %vm144, %v944, 0
  %v985 = vsel %vm144, %v945, 0
  %v988 = vsel %vm144, %v946, 0
  %v991 = vsel %vm144, %v947, 0
  %v994 = vsel %vm144, %v948, 0
  %v997 = vsel %vm144, %v949, 0
  %v1000 = vsel %vm144, %v950, 0
  %v1003 = vsel %vm144, %v951, 0
  %v1006 = vsel %vm144, %v952, 0
  %v1009 = vsel %vm144, %v953, 0
  %v1012 = vsel %vm144, %v954, 0
  %v1015 = vsel %vm144, %v955, 0
  %v1018 = vsel %vm144, %v956, 0
  %v1021 = vsel %vm144, %v957, 0
  %v1024 = vsel %vm144, %v958, 0
  %v1027 = vsel %vm144, %v959, 0
  %v1030 = vsel %vm144, %v960, 0
  %v1033 = vsel %vm144, %v961, 0
  %v1036 = vsel %vm144, %v962, 0
  %1038 = vmatprep.subr.bf16.mxu0 0
  %1039 = vmatpush1.bf16.msra.mxu0 0
  %1040 = vmatprep.subr.bf16.mxu0 0
  %1041 = vmatpush1.bf16.msra.mxu0 0
  %1042 = vmatprep.subr.bf16.mxu0 0
  %1043 = vmatpush1.bf16.msra.mxu0 0
  %1044 = vmatprep.subr.bf16.mxu0 0
  %1045 = vmatpush1.bf16.msra.mxu0 %v225
  %1046 = vmatprep.subr.bf16.mxu0 0
  %1047 = vmatpush1.bf16.msra.mxu0 %v138
  %1048 = vmatprep.subr.bf16.mxu0 0
  %1049 = vmatpush1.bf16.msra.mxu0 %v137
  %1050 = vmatprep.subr.bf16.mxu0 0
  %1051 = vmatpush1.bf16.msra.mxu0 %v136
  %1052 = vmatprep.subr.bf16.mxu0 0
  %1053 = vmatpush1.bf16.msra.mxu0 %v135
  %1054 = vmatprep.subr.bf16.mxu0 0
  %1055 = vmatpush2.bf16.msra.mxu0 0
  %1056 = vmatprep.subr.bf16.mxu0 0
  %1057 = vmatpush2.bf16.msra.mxu0 0
  %1058 = vmatprep.subr.bf16.mxu0 0
  %1059 = vmatpush2.bf16.msra.mxu0 0
  %1060 = vmatprep.subr.bf16.mxu0 0
  %1061 = vmatpush2.bf16.msra.mxu0 0
  %1062 = vmatprep.subr.bf16.mxu0 0
  %1063 = vmatpush2.bf16.msra.mxu0 0
  %1064 = vmatprep.subr.bf16.mxu0 0
  %1065 = vmatpush2.bf16.msra.mxu0 0
  %1066 = vmatprep.subr.bf16.mxu0 0
  %1067 = vmatpush2.bf16.msra.mxu0 0
  %1068 = vmatprep.subr.bf16.mxu0 0
  %1069 = vmatpush2.bf16.msra.mxu0 0
  %1070 = vmatprep.mubr.bf16.mxu0 0
  %1071 = vmatmul.mubr.bf16.gmra.mxu0 %v964
  %v1072 = vpop.f32.mrf.mxu0
  %v1073 = vadd.f32 %v113, %v1072
  %v1074 = vpop.f32.mrf.mxu0
  %v1075 = vpop.f32.mrf.mxu0
  %v1076 = vadd.f32 %v113, %v1075
  %v1077 = vpop.f32.mrf.mxu0
  %1078 = vmatprep.mubr.bf16.mxu0 0
  %1079 = vmatmul.mubr.bf16.gmra.mxu0 %v967
  %v1080 = vpop.f32.mrf.mxu0
  %v1081 = vadd.f32 %v113, %v1080
  %v1082 = vpop.f32.mrf.mxu0
  %v1083 = vpop.f32.mrf.mxu0
  %v1084 = vadd.f32 %v113, %v1083
  %v1085 = vpop.f32.mrf.mxu0
  %1086 = vmatprep.mubr.bf16.mxu0 0
  %1087 = vmatmul.mubr.bf16.gmra.mxu0 %v970
  %v1088 = vpop.f32.mrf.mxu0
  %v1089 = vadd.f32 %v113, %v1088
  %v1090 = vpop.f32.mrf.mxu0
  %v1091 = vpop.f32.mrf.mxu0
  %v1092 = vadd.f32 %v113, %v1091
  %v1093 = vpop.f32.mrf.mxu0
  %1094 = vmatprep.mubr.bf16.mxu0 0
  %1095 = vmatmul.mubr.bf16.gmra.mxu0 %v973
  %v1096 = vpop.f32.mrf.mxu0
  %v1097 = vadd.f32 %v113, %v1096
  %v1098 = vpop.f32.mrf.mxu0
  %v1099 = vpop.f32.mrf.mxu0
  %v1100 = vadd.f32 %v113, %v1099
  %v1101 = vpop.f32.mrf.mxu0
  %1102 = vmatprep.mubr.bf16.mxu0 0
  %1103 = vmatmul.mubr.bf16.gmra.mxu0 %v976
  %v1104 = vpop.f32.mrf.mxu0
  %v1105 = vadd.f32 %v113, %v1104
  %v1106 = vpop.f32.mrf.mxu0
  %v1107 = vpop.f32.mrf.mxu0
  %v1108 = vadd.f32 %v113, %v1107
  %v1109 = vpop.f32.mrf.mxu0
  %1110 = vmatprep.mubr.bf16.mxu0 0
  %1111 = vmatmul.mubr.bf16.gmra.mxu0 %v979
  %v1112 = vpop.f32.mrf.mxu0
  %v1113 = vadd.f32 %v113, %v1112
  %v1114 = vpop.f32.mrf.mxu0
  %v1115 = vpop.f32.mrf.mxu0
  %v1116 = vadd.f32 %v113, %v1115
  %v1117 = vpop.f32.mrf.mxu0
  %1118 = vmatprep.mubr.bf16.mxu0 0
  %1119 = vmatmul.mubr.bf16.gmra.mxu0 %v982
  %v1120 = vpop.f32.mrf.mxu0
  %v1121 = vadd.f32 %v113, %v1120
  %v1122 = vpop.f32.mrf.mxu0
  %v1123 = vpop.f32.mrf.mxu0
  %v1124 = vadd.f32 %v113, %v1123
  %v1125 = vpop.f32.mrf.mxu0
  %1126 = vmatprep.mubr.bf16.mxu0 0
  %1127 = vmatmul.mubr.bf16.gmra.mxu0 %v985
  %v1128 = vpop.f32.mrf.mxu0
  %v1129 = vadd.f32 %v113, %v1128
  %v1130 = vpop.f32.mrf.mxu0
  %v1131 = vpop.f32.mrf.mxu0
  %v1132 = vadd.f32 %v113, %v1131
  %v1133 = vpop.f32.mrf.mxu0
  %1134 = vmatprep.mubr.bf16.mxu0 0
  %1135 = vmatmul.mubr.bf16.gmra.mxu0 %v988
  %v1136 = vpop.f32.mrf.mxu0
  %v1137 = vadd.f32 %v113, %v1136
  %v1138 = vpop.f32.mrf.mxu0
  %v1139 = vpop.f32.mrf.mxu0
  %v1140 = vadd.f32 %v113, %v1139
  %v1141 = vpop.f32.mrf.mxu0
  %1142 = vmatprep.mubr.bf16.mxu0 0
  %1143 = vmatmul.mubr.bf16.gmra.mxu0 %v991
  %v1144 = vpop.f32.mrf.mxu0
  %v1145 = vadd.f32 %v113, %v1144
  %v1146 = vpop.f32.mrf.mxu0
  %v1147 = vpop.f32.mrf.mxu0
  %v1148 = vadd.f32 %v113, %v1147
  %v1149 = vpop.f32.mrf.mxu0
  %1150 = vmatprep.mubr.bf16.mxu0 0
  %1151 = vmatmul.mubr.bf16.gmra.mxu0 %v994
  %v1152 = vpop.f32.mrf.mxu0
  %v1153 = vadd.f32 %v113, %v1152
  %v1154 = vpop.f32.mrf.mxu0
  %v1155 = vpop.f32.mrf.mxu0
  %v1156 = vadd.f32 %v113, %v1155
  %v1157 = vpop.f32.mrf.mxu0
  %1158 = vmatprep.mubr.bf16.mxu0 0
  %1159 = vmatmul.mubr.bf16.gmra.mxu0 %v997
  %v1160 = vpop.f32.mrf.mxu0
  %v1161 = vadd.f32 %v113, %v1160
  %v1162 = vpop.f32.mrf.mxu0
  %v1163 = vpop.f32.mrf.mxu0
  %v1164 = vadd.f32 %v113, %v1163
  %v1165 = vpop.f32.mrf.mxu0
  %1166 = vmatprep.mubr.bf16.mxu0 0
  %1167 = vmatmul.mubr.bf16.gmra.mxu0 %v1000
  %v1168 = vpop.f32.mrf.mxu0
  %v1169 = vadd.f32 %v113, %v1168
  %v1170 = vpop.f32.mrf.mxu0
  %v1171 = vpop.f32.mrf.mxu0
  %v1172 = vadd.f32 %v113, %v1171
  %v1173 = vpop.f32.mrf.mxu0
  %1174 = vmatprep.mubr.bf16.mxu0 0
  %1175 = vmatmul.mubr.bf16.gmra.mxu0 %v1003
  %v1176 = vpop.f32.mrf.mxu0
  %v1177 = vadd.f32 %v113, %v1176
  %v1178 = vpop.f32.mrf.mxu0
  %v1179 = vpop.f32.mrf.mxu0
  %v1180 = vadd.f32 %v113, %v1179
  %v1181 = vpop.f32.mrf.mxu0
  %1182 = vmatprep.mubr.bf16.mxu0 0
  %1183 = vmatmul.mubr.bf16.gmra.mxu0 %v1006
  %v1184 = vpop.f32.mrf.mxu0
  %v1185 = vadd.f32 %v113, %v1184
  %v1186 = vpop.f32.mrf.mxu0
  %v1187 = vpop.f32.mrf.mxu0
  %v1188 = vadd.f32 %v113, %v1187
  %v1189 = vpop.f32.mrf.mxu0
  %1190 = vmatprep.mubr.bf16.mxu0 0
  %1191 = vmatmul.mubr.bf16.gmra.mxu0 %v1009
  %v1192 = vpop.f32.mrf.mxu0
  %v1193 = vadd.f32 %v113, %v1192
  %v1194 = vpop.f32.mrf.mxu0
  %v1195 = vpop.f32.mrf.mxu0
  %v1196 = vadd.f32 %v113, %v1195
  %v1197 = vpop.f32.mrf.mxu0
  %1198 = vmatprep.mubr.bf16.mxu0 0
  %1199 = vmatmul.mubr.bf16.gmra.mxu0 %v1012
  %v1200 = vpop.f32.mrf.mxu0
  %v1201 = vadd.f32 %v113, %v1200
  %v1202 = vpop.f32.mrf.mxu0
  %v1203 = vpop.f32.mrf.mxu0
  %v1204 = vadd.f32 %v113, %v1203
  %v1205 = vpop.f32.mrf.mxu0
  %1206 = vmatprep.mubr.bf16.mxu0 0
  %1207 = vmatmul.mubr.bf16.gmra.mxu0 %v1015
  %v1208 = vpop.f32.mrf.mxu0
  %v1209 = vadd.f32 %v113, %v1208
  %v1210 = vpop.f32.mrf.mxu0
  %v1211 = vpop.f32.mrf.mxu0
  %v1212 = vadd.f32 %v113, %v1211
  %v1213 = vpop.f32.mrf.mxu0
  %1214 = vmatprep.mubr.bf16.mxu0 0
  %1215 = vmatmul.mubr.bf16.gmra.mxu0 %v1018
  %v1216 = vpop.f32.mrf.mxu0
  %v1217 = vadd.f32 %v113, %v1216
  %v1218 = vpop.f32.mrf.mxu0
  %v1219 = vpop.f32.mrf.mxu0
  %v1220 = vadd.f32 %v113, %v1219
  %v1221 = vpop.f32.mrf.mxu0
  %1222 = vmatprep.mubr.bf16.mxu0 0
  %1223 = vmatmul.mubr.bf16.gmra.mxu0 %v1021
  %v1224 = vpop.f32.mrf.mxu0
  %v1225 = vadd.f32 %v113, %v1224
  %v1226 = vpop.f32.mrf.mxu0
  %v1227 = vpop.f32.mrf.mxu0
  %v1228 = vadd.f32 %v113, %v1227
  %v1229 = vpop.f32.mrf.mxu0
  %1230 = vmatprep.mubr.bf16.mxu0 0
  %1231 = vmatmul.mubr.bf16.gmra.mxu0 %v1024
  %v1232 = vpop.f32.mrf.mxu0
  %v1233 = vadd.f32 %v113, %v1232
  %v1234 = vpop.f32.mrf.mxu0
  %v1235 = vpop.f32.mrf.mxu0
  %v1236 = vadd.f32 %v113, %v1235
  %v1237 = vpop.f32.mrf.mxu0
  %1238 = vmatprep.mubr.bf16.mxu0 0
  %1239 = vmatmul.mubr.bf16.gmra.mxu0 %v1027
  %v1240 = vpop.f32.mrf.mxu0
  %v1241 = vadd.f32 %v113, %v1240
  %v1242 = vpop.f32.mrf.mxu0
  %v1243 = vpop.f32.mrf.mxu0
  %v1244 = vadd.f32 %v113, %v1243
  %v1245 = vpop.f32.mrf.mxu0
  %1246 = vmatprep.mubr.bf16.mxu0 0
  %1247 = vmatmul.mubr.bf16.gmra.mxu0 %v1030
  %v1248 = vpop.f32.mrf.mxu0
  %v1249 = vadd.f32 %v113, %v1248
  %v1250 = vpop.f32.mrf.mxu0
  %v1251 = vpop.f32.mrf.mxu0
  %v1252 = vadd.f32 %v113, %v1251
  %v1253 = vpop.f32.mrf.mxu0
  %1254 = vmatprep.mubr.bf16.mxu0 0
  %1255 = vmatmul.mubr.bf16.gmra.mxu0 %v1033
  %v1256 = vpop.f32.mrf.mxu0
  %v1257 = vadd.f32 %v113, %v1256
  %v1258 = vpop.f32.mrf.mxu0
  %v1259 = vpop.f32.mrf.mxu0
  %v1260 = vadd.f32 %v113, %v1259
  %v1261 = vpop.f32.mrf.mxu0
  %1262 = vmatprep.mubr.bf16.mxu0 0
  %1263 = vmatmul.mubr.bf16.gmra.mxu0 %v1036
  %v1264 = vpop.f32.mrf.mxu0
  %v1265 = vadd.f32 %v113, %v1264
  %v1266 = vpop.f32.mrf.mxu0
  %v1267 = vpop.f32.mrf.mxu0
  %v1268 = vpop.f32.mrf.mxu0
  %1269 = vdwg.mxu0
  %v1270 = vld [vmem:[%s3] sm:$0xff]
  %v1271 = vld [vmem:[%s3 + $0x8] sm:$0xff]
  %v1272 = vld [vmem:[%s3 + $0x10] sm:$0xff]
  %v1273 = vld [vmem:[%s3 + $0x18] sm:$0xff]
  %v1274 = vld [vmem:[%s3 + $0x20] sm:$0xff]
  %v1275 = vld [vmem:[%s3 + $0x28] sm:$0xff]
  %v1276 = vld [vmem:[%s3 + $0x30] sm:$0xff]
  %v1277 = vld [vmem:[%s3 + $0x38] sm:$0xff]
  %v1278 = vld [vmem:[%s3 + $0x40] sm:$0xff]
  %v1279 = vld [vmem:[%s3 + $0x48] sm:$0xff]
  %v1280 = vld [vmem:[%s3 + $0x50] sm:$0xff]
  %v1281 = vld [vmem:[%s3 + $0x58] sm:$0xff]
  %v1282 = vld [vmem:[%s3 + $0x60] sm:$0xff]
  %v1283 = vld [vmem:[%s3 + $0x68] sm:$0xff]
  %v1284 = vld [vmem:[%s3 + $0x70] sm:$0xff]
  %v1285 = vld [vmem:[%s3 + $0x78] sm:$0xff]
  %v1286 = vld [vmem:[%s3 + $0x80] sm:$0xff]
  %v1287 = vld [vmem:[%s3 + $0x88] sm:$0xff]
  %v1288 = vld [vmem:[%s3 + $0x90] sm:$0xff]
  %v1289 = vld [vmem:[%s3 + $0x98] sm:$0xff]
  %v1290 = vld [vmem:[%s3 + $0xa0] sm:$0xff]
  %v1291 = vld [vmem:[%s3 + $0xa8] sm:$0xff]
  %v1292 = vld [vmem:[%s3 + $0xb0] sm:$0xff]
  %v1293 = vld [vmem:[%s3 + $0xb8] sm:$0xff]
  %v1294 = vld [vmem:[%s3 + $0xc0] sm:$0xff]
  %v1295 = vld [vmem:[%s3 + $0xc8] sm:$0xff]
  %v1296 = vld [vmem:[%s3 + $0xd0] sm:$0xff]
  %v1297 = vld [vmem:[%s3 + $0xd8] sm:$0xff]
  %v1298 = vld [vmem:[%s3 + $0xe0] sm:$0xff]
  %v1299 = vld [vmem:[%s3 + $0xe8] sm:$0xff]
  %v1300 = vld [vmem:[%s3 + $0xf0] sm:$0xff]
  %v1301 = vld [vmem:[%s3 + $0xf8] sm:$0xff]
  %v1302 = vld [vmem:[%s3 + $0x100] sm:$0xff]
  %v1303 = vld [vmem:[%s3 + $0x108] sm:$0xff]
  %v1304 = vld [vmem:[%s3 + $0x110] sm:$0xff]
  %v1305 = vld [vmem:[%s3 + $0x118] sm:$0xff]
  %v1306 = vld [vmem:[%s3 + $0x120] sm:$0xff]
  %v1307 = vld [vmem:[%s3 + $0x128] sm:$0xff]
  %v1308 = vld [vmem:[%s3 + $0x130] sm:$0xff]
  %v1309 = vld [vmem:[%s3 + $0x138] sm:$0xff]
  %v1310 = vld [vmem:[%s3 + $0x140] sm:$0xff]
  %v1311 = vld [vmem:[%s3 + $0x148] sm:$0xff]
  %v1312 = vld [vmem:[%s3 + $0x150] sm:$0xff]
  %v1313 = vld [vmem:[%s3 + $0x158] sm:$0xff]
  %v1314 = vld [vmem:[%s3 + $0x160] sm:$0xff]
  %v1315 = vld [vmem:[%s3 + $0x168] sm:$0xff]
  %v1316 = vld [vmem:[%s3 + $0x170] sm:$0xff]
  %v1317 = vld [vmem:[%s3 + $0x178] sm:$0xff]
  %v1318 = vld [vmem:[%s3 + $0x180] sm:$0xff]
  %v1319 = vpack.c.bf16 %v1271, %v1270
  %v1320 = vpack.c.bf16 %v1273, %v1272
  %v1321 = vpack.c.bf16 %v1275, %v1274
  %v1322 = vpack.c.bf16 %v1277, %v1276
  %v1323 = vpack.c.bf16 %v1279, %v1278
  %v1324 = vpack.c.bf16 %v1281, %v1280
  %v1325 = vpack.c.bf16 %v1283, %v1282
  %v1326 = vpack.c.bf16 %v1285, %v1284
  %v1327 = vpack.c.bf16 %v1287, %v1286
  %v1328 = vpack.c.bf16 %v1289, %v1288
  %v1329 = vpack.c.bf16 %v1291, %v1290
  %v1330 = vpack.c.bf16 %v1293, %v1292
  %v1331 = vpack.c.bf16 %v1295, %v1294
  %v1332 = vpack.c.bf16 %v1297, %v1296
  %v1333 = vpack.c.bf16 %v1299, %v1298
  %v1334 = vpack.c.bf16 %v1301, %v1300
  %v1335 = vpack.c.bf16 %v1303, %v1302
  %v1336 = vpack.c.bf16 %v1305, %v1304
  %v1337 = vpack.c.bf16 %v1307, %v1306
  %v1338 = vpack.c.bf16 %v1309, %v1308
  %v1339 = vpack.c.bf16 %v1311, %v1310
  %v1340 = vpack.c.bf16 %v1313, %v1312
  %v1341 = vpack.c.bf16 %v1315, %v1314
  %v1342 = vpack.c.bf16 %v1317, %v1316
  %v1343 = vpack.c.bf16 %v1318, %v1318
  %v1345 = vsel %vm144, %v1319, 0
  %v1348 = vsel %vm144, %v1320, 0
  %v1351 = vsel %vm144, %v1321, 0
  %v1354 = vsel %vm144, %v1322, 0
  %v1357 = vsel %vm144, %v1323, 0
  %v1360 = vsel %vm144, %v1324, 0
  %v1363 = vsel %vm144, %v1325, 0
  %v1366 = vsel %vm144, %v1326, 0
  %v1369 = vsel %vm144, %v1327, 0
  %v1372 = vsel %vm144, %v1328, 0
  %v1375 = vsel %vm144, %v1329, 0
  %v1378 = vsel %vm144, %v1330, 0
  %v1381 = vsel %vm144, %v1331, 0
  %v1384 = vsel %vm144, %v1332, 0
  %v1387 = vsel %vm144, %v1333, 0
  %v1390 = vsel %vm144, %v1334, 0
  %v1393 = vsel %vm144, %v1335, 0
  %v1396 = vsel %vm144, %v1336, 0
  %v1399 = vsel %vm144, %v1337, 0
  %v1402 = vsel %vm144, %v1338, 0
  %v1405 = vsel %vm144, %v1339, 0
  %v1408 = vsel %vm144, %v1340, 0
  %v1411 = vsel %vm144, %v1341, 0
  %v1414 = vsel %vm144, %v1342, 0
  %v1417 = vsel %vm144, %v1343, 0
  %1419 = vmatprep.subr.bf16.mxu0 0
  %1420 = vmatpush1.bf16.msra.mxu0 0
  %1421 = vmatprep.subr.bf16.mxu0 0
  %1422 = vmatpush1.bf16.msra.mxu0 0
  %1423 = vmatprep.subr.bf16.mxu0 0
  %1424 = vmatpush1.bf16.msra.mxu0 0
  %1425 = vmatprep.subr.bf16.mxu0 0
  %1426 = vmatpush1.bf16.msra.mxu0 %v225
  %1427 = vmatprep.subr.bf16.mxu0 0
  %1428 = vmatpush1.bf16.msra.mxu0 %v138
  %1429 = vmatprep.subr.bf16.mxu0 0
  %1430 = vmatpush1.bf16.msra.mxu0 %v137
  %1431 = vmatprep.subr.bf16.mxu0 0
  %1432 = vmatpush1.bf16.msra.mxu0 %v136
  %1433 = vmatprep.subr.bf16.mxu0 0
  %1434 = vmatpush1.bf16.msra.mxu0 %v135
  %1435 = vmatprep.subr.bf16.mxu0 0
  %1436 = vmatpush2.bf16.msra.mxu0 0
  %1437 = vmatprep.subr.bf16.mxu0 0
  %1438 = vmatpush2.bf16.msra.mxu0 0
  %1439 = vmatprep.subr.bf16.mxu0 0
  %1440 = vmatpush2.bf16.msra.mxu0 0
  %1441 = vmatprep.subr.bf16.mxu0 0
  %1442 = vmatpush2.bf16.msra.mxu0 0
  %1443 = vmatprep.subr.bf16.mxu0 0
  %1444 = vmatpush2.bf16.msra.mxu0 0
  %1445 = vmatprep.subr.bf16.mxu0 0
  %1446 = vmatpush2.bf16.msra.mxu0 0
  %1447 = vmatprep.subr.bf16.mxu0 0
  %1448 = vmatpush2.bf16.msra.mxu0 0
  %1449 = vmatprep.subr.bf16.mxu0 0
  %1450 = vmatpush2.bf16.msra.mxu0 0
  %1451 = vmatprep.mubr.bf16.mxu0 0
  %1452 = vmatmul.mubr.bf16.gmra.mxu0 %v1345
  %v1453 = vpop.f32.mrf.mxu0
  %v1454 = vadd.f32 %v113, %v1453
  %v1455 = vpop.f32.mrf.mxu0
  %v1456 = vpop.f32.mrf.mxu0
  %v1457 = vadd.f32 %v113, %v1456
  %v1458 = vpop.f32.mrf.mxu0
  %1459 = vmatprep.mubr.bf16.mxu0 0
  %1460 = vmatmul.mubr.bf16.gmra.mxu0 %v1348
  %v1461 = vpop.f32.mrf.mxu0
  %v1462 = vadd.f32 %v113, %v1461
  %v1463 = vpop.f32.mrf.mxu0
  %v1464 = vpop.f32.mrf.mxu0
  %v1465 = vadd.f32 %v113, %v1464
  %v1466 = vpop.f32.mrf.mxu0
  %1467 = vmatprep.mubr.bf16.mxu0 0
  %1468 = vmatmul.mubr.bf16.gmra.mxu0 %v1351
  %v1469 = vpop.f32.mrf.mxu0
  %v1470 = vadd.f32 %v113, %v1469
  %v1471 = vpop.f32.mrf.mxu0
  %v1472 = vpop.f32.mrf.mxu0
  %v1473 = vadd.f32 %v113, %v1472
  %v1474 = vpop.f32.mrf.mxu0
  %1475 = vmatprep.mubr.bf16.mxu0 0
  %1476 = vmatmul.mubr.bf16.gmra.mxu0 %v1354
  %v1477 = vpop.f32.mrf.mxu0
  %v1478 = vadd.f32 %v113, %v1477
  %v1479 = vpop.f32.mrf.mxu0
  %v1480 = vpop.f32.mrf.mxu0
  %v1481 = vadd.f32 %v113, %v1480
  %v1482 = vpop.f32.mrf.mxu0
  %1483 = vmatprep.mubr.bf16.mxu0 0
  %1484 = vmatmul.mubr.bf16.gmra.mxu0 %v1357
  %v1485 = vpop.f32.mrf.mxu0
  %v1486 = vadd.f32 %v113, %v1485
  %v1487 = vpop.f32.mrf.mxu0
  %v1488 = vpop.f32.mrf.mxu0
  %v1489 = vadd.f32 %v113, %v1488
  %v1490 = vpop.f32.mrf.mxu0
  %1491 = vmatprep.mubr.bf16.mxu0 0
  %1492 = vmatmul.mubr.bf16.gmra.mxu0 %v1360
  %v1493 = vpop.f32.mrf.mxu0
  %v1494 = vadd.f32 %v113, %v1493
  %v1495 = vpop.f32.mrf.mxu0
  %v1496 = vpop.f32.mrf.mxu0
  %v1497 = vadd.f32 %v113, %v1496
  %v1498 = vpop.f32.mrf.mxu0
  %1499 = vmatprep.mubr.bf16.mxu0 0
  %1500 = vmatmul.mubr.bf16.gmra.mxu0 %v1363
  %v1501 = vpop.f32.mrf.mxu0
  %v1502 = vadd.f32 %v113, %v1501
  %v1503 = vpop.f32.mrf.mxu0
  %v1504 = vpop.f32.mrf.mxu0
  %v1505 = vadd.f32 %v113, %v1504
  %v1506 = vpop.f32.mrf.mxu0
  %1507 = vmatprep.mubr.bf16.mxu0 0
  %1508 = vmatmul.mubr.bf16.gmra.mxu0 %v1366
  %v1509 = vpop.f32.mrf.mxu0
  %v1510 = vadd.f32 %v113, %v1509
  %v1511 = vpop.f32.mrf.mxu0
  %v1512 = vpop.f32.mrf.mxu0
  %v1513 = vadd.f32 %v113, %v1512
  %v1514 = vpop.f32.mrf.mxu0
  %1515 = vmatprep.mubr.bf16.mxu0 0
  %1516 = vmatmul.mubr.bf16.gmra.mxu0 %v1369
  %v1517 = vpop.f32.mrf.mxu0
  %v1518 = vadd.f32 %v113, %v1517
  %v1519 = vpop.f32.mrf.mxu0
  %v1520 = vpop.f32.mrf.mxu0
  %v1521 = vadd.f32 %v113, %v1520
  %v1522 = vpop.f32.mrf.mxu0
  %1523 = vmatprep.mubr.bf16.mxu0 0
  %1524 = vmatmul.mubr.bf16.gmra.mxu0 %v1372
  %v1525 = vpop.f32.mrf.mxu0
  %v1526 = vadd.f32 %v113, %v1525
  %v1527 = vpop.f32.mrf.mxu0
  %v1528 = vpop.f32.mrf.mxu0
  %v1529 = vadd.f32 %v113, %v1528
  %v1530 = vpop.f32.mrf.mxu0
  %1531 = vmatprep.mubr.bf16.mxu0 0
  %1532 = vmatmul.mubr.bf16.gmra.mxu0 %v1375
  %v1533 = vpop.f32.mrf.mxu0
  %v1534 = vadd.f32 %v113, %v1533
  %v1535 = vpop.f32.mrf.mxu0
  %v1536 = vpop.f32.mrf.mxu0
  %v1537 = vadd.f32 %v113, %v1536
  %v1538 = vpop.f32.mrf.mxu0
  %1539 = vmatprep.mubr.bf16.mxu0 0
  %1540 = vmatmul.mubr.bf16.gmra.mxu0 %v1378
  %v1541 = vpop.f32.mrf.mxu0
  %v1542 = vadd.f32 %v113, %v1541
  %v1543 = vpop.f32.mrf.mxu0
  %v1544 = vpop.f32.mrf.mxu0
  %v1545 = vadd.f32 %v113, %v1544
  %v1546 = vpop.f32.mrf.mxu0
  %1547 = vmatprep.mubr.bf16.mxu0 0
  %1548 = vmatmul.mubr.bf16.gmra.mxu0 %v1381
  %v1549 = vpop.f32.mrf.mxu0
  %v1550 = vadd.f32 %v113, %v1549
  %v1551 = vpop.f32.mrf.mxu0
  %v1552 = vpop.f32.mrf.mxu0
  %v1553 = vadd.f32 %v113, %v1552
  %v1554 = vpop.f32.mrf.mxu0
  %1555 = vmatprep.mubr.bf16.mxu0 0
  %1556 = vmatmul.mubr.bf16.gmra.mxu0 %v1384
  %v1557 = vpop.f32.mrf.mxu0
  %v1558 = vadd.f32 %v113, %v1557
  %v1559 = vpop.f32.mrf.mxu0
  %v1560 = vpop.f32.mrf.mxu0
  %v1561 = vadd.f32 %v113, %v1560
  %v1562 = vpop.f32.mrf.mxu0
  %1563 = vmatprep.mubr.bf16.mxu0 0
  %1564 = vmatmul.mubr.bf16.gmra.mxu0 %v1387
  %v1565 = vpop.f32.mrf.mxu0
  %v1566 = vadd.f32 %v113, %v1565
  %v1567 = vpop.f32.mrf.mxu0
  %v1568 = vpop.f32.mrf.mxu0
  %v1569 = vadd.f32 %v113, %v1568
  %v1570 = vpop.f32.mrf.mxu0
  %1571 = vmatprep.mubr.bf16.mxu0 0
  %1572 = vmatmul.mubr.bf16.gmra.mxu0 %v1390
  %v1573 = vpop.f32.mrf.mxu0
  %v1574 = vadd.f32 %v113, %v1573
  %v1575 = vpop.f32.mrf.mxu0
  %v1576 = vpop.f32.mrf.mxu0
  %v1577 = vadd.f32 %v113, %v1576
  %v1578 = vpop.f32.mrf.mxu0
  %1579 = vmatprep.mubr.bf16.mxu0 0
  %1580 = vmatmul.mubr.bf16.gmra.mxu0 %v1393
  %v1581 = vpop.f32.mrf.mxu0
  %v1582 = vadd.f32 %v113, %v1581
  %v1583 = vpop.f32.mrf.mxu0
  %v1584 = vpop.f32.mrf.mxu0
  %v1585 = vadd.f32 %v113, %v1584
  %v1586 = vpop.f32.mrf.mxu0
  %1587 = vmatprep.mubr.bf16.mxu0 0
  %1588 = vmatmul.mubr.bf16.gmra.mxu0 %v1396
  %v1589 = vpop.f32.mrf.mxu0
  %v1590 = vadd.f32 %v113, %v1589
  %v1591 = vpop.f32.mrf.mxu0
  %v1592 = vpop.f32.mrf.mxu0
  %v1593 = vadd.f32 %v113, %v1592
  %v1594 = vpop.f32.mrf.mxu0
  %1595 = vmatprep.mubr.bf16.mxu0 0
  %1596 = vmatmul.mubr.bf16.gmra.mxu0 %v1399
  %v1597 = vpop.f32.mrf.mxu0
  %v1598 = vadd.f32 %v113, %v1597
  %v1599 = vpop.f32.mrf.mxu0
  %v1600 = vpop.f32.mrf.mxu0
  %v1601 = vadd.f32 %v113, %v1600
  %v1602 = vpop.f32.mrf.mxu0
  %1603 = vmatprep.mubr.bf16.mxu0 0
  %1604 = vmatmul.mubr.bf16.gmra.mxu0 %v1402
  %v1605 = vpop.f32.mrf.mxu0
  %v1606 = vadd.f32 %v113, %v1605
  %v1607 = vpop.f32.mrf.mxu0
  %v1608 = vpop.f32.mrf.mxu0
  %v1609 = vadd.f32 %v113, %v1608
  %v1610 = vpop.f32.mrf.mxu0
  %1611 = vmatprep.mubr.bf16.mxu0 0
  %1612 = vmatmul.mubr.bf16.gmra.mxu0 %v1405
  %v1613 = vpop.f32.mrf.mxu0
  %v1614 = vadd.f32 %v113, %v1613
  %v1615 = vpop.f32.mrf.mxu0
  %v1616 = vpop.f32.mrf.mxu0
  %v1617 = vadd.f32 %v113, %v1616
  %v1618 = vpop.f32.mrf.mxu0
  %1619 = vmatprep.mubr.bf16.mxu0 0
  %1620 = vmatmul.mubr.bf16.gmra.mxu0 %v1408
  %v1621 = vpop.f32.mrf.mxu0
  %v1622 = vadd.f32 %v113, %v1621
  %v1623 = vpop.f32.mrf.mxu0
  %v1624 = vpop.f32.mrf.mxu0
  %v1625 = vadd.f32 %v113, %v1624
  %v1626 = vpop.f32.mrf.mxu0
  %1627 = vmatprep.mubr.bf16.mxu0 0
  %1628 = vmatmul.mubr.bf16.gmra.mxu0 %v1411
  %v1629 = vpop.f32.mrf.mxu0
  %v1630 = vadd.f32 %v113, %v1629
  %v1631 = vpop.f32.mrf.mxu0
  %v1632 = vpop.f32.mrf.mxu0
  %v1633 = vadd.f32 %v113, %v1632
  %v1634 = vpop.f32.mrf.mxu0
  %1635 = vmatprep.mubr.bf16.mxu0 0
  %1636 = vmatmul.mubr.bf16.gmra.mxu0 %v1414
  %v1637 = vpop.f32.mrf.mxu0
  %v1638 = vadd.f32 %v113, %v1637
  %v1639 = vpop.f32.mrf.mxu0
  %v1640 = vpop.f32.mrf.mxu0
  %v1641 = vadd.f32 %v113, %v1640
  %v1642 = vpop.f32.mrf.mxu0
  %1643 = vmatprep.mubr.bf16.mxu0 0
  %1644 = vmatmul.mubr.bf16.gmra.mxu0 %v1417
  %v1645 = vpop.f32.mrf.mxu0
  %v1646 = vadd.f32 %v113, %v1645
  %v1647 = vpop.f32.mrf.mxu0
  %v1648 = vpop.f32.mrf.mxu0
  %v1649 = vpop.f32.mrf.mxu0
  %1650 = vdwg.mxu0
  %v1651 = vmax.f32 %v1073, %v1454
  %v1652 = vmax.f32 %v1076, %v1457
  %v1653 = vmax.f32 %v1081, %v1462
  %v1654 = vmax.f32 %v1084, %v1465
  %v1655 = vmax.f32 %v1089, %v1470
  %v1656 = vmax.f32 %v1092, %v1473
  %v1657 = vmax.f32 %v1097, %v1478
  %v1658 = vmax.f32 %v1100, %v1481
  %v1659 = vmax.f32 %v1105, %v1486
  %v1660 = vmax.f32 %v1108, %v1489
  %v1661 = vmax.f32 %v1113, %v1494
  %v1662 = vmax.f32 %v1116, %v1497
  %v1663 = vmax.f32 %v1121, %v1502
  %v1664 = vmax.f32 %v1124, %v1505
  %v1665 = vmax.f32 %v1129, %v1510
  %v1666 = vmax.f32 %v1132, %v1513
  %v1667 = vmax.f32 %v1137, %v1518
  %v1668 = vmax.f32 %v1140, %v1521
  %v1669 = vmax.f32 %v1145, %v1526
  %v1670 = vmax.f32 %v1148, %v1529
  %v1671 = vmax.f32 %v1153, %v1534
  %v1672 = vmax.f32 %v1156, %v1537
  %v1673 = vmax.f32 %v1161, %v1542
  %v1674 = vmax.f32 %v1164, %v1545
  %v1675 = vmax.f32 %v1169, %v1550
  %v1676 = vmax.f32 %v1172, %v1553
  %v1677 = vmax.f32 %v1177, %v1558
  %v1678 = vmax.f32 %v1180, %v1561
  %v1679 = vmax.f32 %v1185, %v1566
  %v1680 = vmax.f32 %v1188, %v1569
  %v1681 = vmax.f32 %v1193, %v1574
  %v1682 = vmax.f32 %v1196, %v1577
  %v1683 = vmax.f32 %v1201, %v1582
  %v1684 = vmax.f32 %v1204, %v1585
  %v1685 = vmax.f32 %v1209, %v1590
  %v1686 = vmax.f32 %v1212, %v1593
  %v1687 = vmax.f32 %v1217, %v1598
  %v1688 = vmax.f32 %v1220, %v1601
  %v1689 = vmax.f32 %v1225, %v1606
  %v1690 = vmax.f32 %v1228, %v1609
  %v1691 = vmax.f32 %v1233, %v1614
  %v1692 = vmax.f32 %v1236, %v1617
  %v1693 = vmax.f32 %v1241, %v1622
  %v1694 = vmax.f32 %v1244, %v1625
  %v1695 = vmax.f32 %v1249, %v1630
  %v1696 = vmax.f32 %v1252, %v1633
  %v1697 = vmax.f32 %v1257, %v1638
  %v1698 = vmax.f32 %v1260, %v1641
  %v1699 = vmax.f32 %v1265, %v1646
  %v1700 = vmax.f32 %v840, %v1651
  %v1701 = vmax.f32 %v841, %v1652
  %v1702 = vmax.f32 %v842, %v1653
  %v1703 = vmax.f32 %v843, %v1654
  %v1704 = vmax.f32 %v844, %v1655
  %v1705 = vmax.f32 %v845, %v1656
  %v1706 = vmax.f32 %v846, %v1657
  %v1707 = vmax.f32 %v847, %v1658
  %v1708 = vmax.f32 %v848, %v1659
  %v1709 = vmax.f32 %v849, %v1660
  %v1710 = vmax.f32 %v850, %v1661
  %v1711 = vmax.f32 %v851, %v1662
  %v1712 = vmax.f32 %v852, %v1663
  %v1713 = vmax.f32 %v853, %v1664
  %v1714 = vmax.f32 %v854, %v1665
  %v1715 = vmax.f32 %v855, %v1666
  %v1716 = vmax.f32 %v856, %v1667
  %v1717 = vmax.f32 %v857, %v1668
  %v1718 = vmax.f32 %v858, %v1669
  %v1719 = vmax.f32 %v859, %v1670
  %v1720 = vmax.f32 %v860, %v1671
  %v1721 = vmax.f32 %v861, %v1672
  %v1722 = vmax.f32 %v862, %v1673
  %v1723 = vmax.f32 %v863, %v1674
  %v1724 = vmax.f32 %v864, %v1675
  %v1725 = vmax.f32 %v865, %v1676
  %v1726 = vmax.f32 %v866, %v1677
  %v1727 = vmax.f32 %v867, %v1678
  %v1728 = vmax.f32 %v868, %v1679
  %v1729 = vmax.f32 %v869, %v1680
  %v1730 = vmax.f32 %v870, %v1681
  %v1731 = vmax.f32 %v871, %v1682
  %v1732 = vmax.f32 %v872, %v1683
  %v1733 = vmax.f32 %v873, %v1684
  %v1734 = vmax.f32 %v874, %v1685
  %v1735 = vmax.f32 %v875, %v1686
  %v1736 = vmax.f32 %v876, %v1687
  %v1737 = vmax.f32 %v877, %v1688
  %v1738 = vmax.f32 %v878, %v1689
  %v1739 = vmax.f32 %v879, %v1690
  %v1740 = vmax.f32 %v880, %v1691
  %v1741 = vmax.f32 %v881, %v1692
  %v1742 = vmax.f32 %v882, %v1693
  %v1743 = vmax.f32 %v883, %v1694
  %v1744 = vmax.f32 %v884, %v1695
  %v1745 = vmax.f32 %v885, %v1696
  %v1746 = vmax.f32 %v886, %v1697
  %v1747 = vmax.f32 %v887, %v1698
  %v1748 = vmax.f32 %v888, %v1699
  %v1749 = vmax.f32 %v1700, 0.0
  %v1750 = vmax.f32 %v1701, 0.0
  %v1751 = vmax.f32 %v1702, 0.0
  %v1752 = vmax.f32 %v1703, 0.0
  %v1753 = vmax.f32 %v1704, 0.0
  %v1754 = vmax.f32 %v1705, 0.0
  %v1755 = vmax.f32 %v1706, 0.0
  %v1756 = vmax.f32 %v1707, 0.0
  %v1757 = vmax.f32 %v1708, 0.0
  %v1758 = vmax.f32 %v1709, 0.0
  %v1759 = vmax.f32 %v1710, 0.0
  %v1760 = vmax.f32 %v1711, 0.0
  %v1761 = vmax.f32 %v1712, 0.0
  %v1762 = vmax.f32 %v1713, 0.0
  %v1763 = vmax.f32 %v1714, 0.0
  %v1764 = vmax.f32 %v1715, 0.0
  %v1765 = vmax.f32 %v1716, 0.0
  %v1766 = vmax.f32 %v1717, 0.0
  %v1767 = vmax.f32 %v1718, 0.0
  %v1768 = vmax.f32 %v1719, 0.0
  %v1769 = vmax.f32 %v1720, 0.0
  %v1770 = vmax.f32 %v1721, 0.0
  %v1771 = vmax.f32 %v1722, 0.0
  %v1772 = vmax.f32 %v1723, 0.0
  %v1773 = vmax.f32 %v1724, 0.0
  %v1774 = vmax.f32 %v1725, 0.0
  %v1775 = vmax.f32 %v1726, 0.0
  %v1776 = vmax.f32 %v1727, 0.0
  %v1777 = vmax.f32 %v1728, 0.0
  %v1778 = vmax.f32 %v1729, 0.0
  %v1779 = vmax.f32 %v1730, 0.0
  %v1780 = vmax.f32 %v1731, 0.0
  %v1781 = vmax.f32 %v1732, 0.0
  %v1782 = vmax.f32 %v1733, 0.0
  %v1783 = vmax.f32 %v1734, 0.0
  %v1784 = vmax.f32 %v1735, 0.0
  %v1785 = vmax.f32 %v1736, 0.0
  %v1786 = vmax.f32 %v1737, 0.0
  %v1787 = vmax.f32 %v1738, 0.0
  %v1788 = vmax.f32 %v1739, 0.0
  %v1789 = vmax.f32 %v1740, 0.0
  %v1790 = vmax.f32 %v1741, 0.0
  %v1791 = vmax.f32 %v1742, 0.0
  %v1792 = vmax.f32 %v1743, 0.0
  %v1793 = vmax.f32 %v1744, 0.0
  %v1794 = vmax.f32 %v1745, 0.0
  %v1795 = vmax.f32 %v1746, 0.0
  %v1796 = vmax.f32 %v1747, 0.0
  %v1797 = vmax.f32 %v1748, 0.0
  %vm1798 = vcmask 48128
  %1799 = vst.msk [vmem:[%s6] sm:$0xff] %vm1798, %v1749
  %1800 = vst.msk [vmem:[%s6 + $0x8] sm:$0xff] %vm1798, %v1750
  %1801 = vst.msk [vmem:[%s6 + $0x10] sm:$0xff] %vm1798, %v1751
  %1802 = vst.msk [vmem:[%s6 + $0x18] sm:$0xff] %vm1798, %v1752
  %1803 = vst.msk [vmem:[%s6 + $0x20] sm:$0xff] %vm1798, %v1753
  %1804 = vst.msk [vmem:[%s6 + $0x28] sm:$0xff] %vm1798, %v1754
  %1805 = vst.msk [vmem:[%s6 + $0x30] sm:$0xff] %vm1798, %v1755
  %1806 = vst.msk [vmem:[%s6 + $0x38] sm:$0xff] %vm1798, %v1756
  %1807 = vst.msk [vmem:[%s6 + $0x40] sm:$0xff] %vm1798, %v1757
  %1808 = vst.msk [vmem:[%s6 + $0x48] sm:$0xff] %vm1798, %v1758
  %1809 = vst.msk [vmem:[%s6 + $0x50] sm:$0xff] %vm1798, %v1759
  %1810 = vst.msk [vmem:[%s6 + $0x58] sm:$0xff] %vm1798, %v1760
  %1811 = vst.msk [vmem:[%s6 + $0x60] sm:$0xff] %vm1798, %v1761
  %1812 = vst.msk [vmem:[%s6 + $0x68] sm:$0xff] %vm1798, %v1762
  %1813 = vst.msk [vmem:[%s6 + $0x70] sm:$0xff] %vm1798, %v1763
  %1814 = vst.msk [vmem:[%s6 + $0x78] sm:$0xff] %vm1798, %v1764
  %1815 = vst.msk [vmem:[%s6 + $0x80] sm:$0xff] %vm1798, %v1765
  %1816 = vst.msk [vmem:[%s6 + $0x88] sm:$0xff] %vm1798, %v1766
  %1817 = vst.msk [vmem:[%s6 + $0x90] sm:$0xff] %vm1798, %v1767
  %1818 = vst.msk [vmem:[%s6 + $0x98] sm:$0xff] %vm1798, %v1768
  %1819 = vst.msk [vmem:[%s6 + $0xa0] sm:$0xff] %vm1798, %v1769
  %1820 = vst.msk [vmem:[%s6 + $0xa8] sm:$0xff] %vm1798, %v1770
  %1821 = vst.msk [vmem:[%s6 + $0xb0] sm:$0xff] %vm1798, %v1771
  %1822 = vst.msk [vmem:[%s6 + $0xb8] sm:$0xff] %vm1798, %v1772
  %1823 = vst.msk [vmem:[%s6 + $0xc0] sm:$0xff] %vm1798, %v1773
  %1824 = vst.msk [vmem:[%s6 + $0xc8] sm:$0xff] %vm1798, %v1774
  %1825 = vst.msk [vmem:[%s6 + $0xd0] sm:$0xff] %vm1798, %v1775
  %1826 = vst.msk [vmem:[%s6 + $0xd8] sm:$0xff] %vm1798, %v1776
  %1827 = vst.msk [vmem:[%s6 + $0xe0] sm:$0xff] %vm1798, %v1777
  %1828 = vst.msk [vmem:[%s6 + $0xe8] sm:$0xff] %vm1798, %v1778
  %1829 = vst.msk [vmem:[%s6 + $0xf0] sm:$0xff] %vm1798, %v1779
  %1830 = vst.msk [vmem:[%s6 + $0xf8] sm:$0xff] %vm1798, %v1780
  %1831 = vst.msk [vmem:[%s6 + $0x100] sm:$0xff] %vm1798, %v1781
  %1832 = vst.msk [vmem:[%s6 + $0x108] sm:$0xff] %vm1798, %v1782
  %1833 = vst.msk [vmem:[%s6 + $0x110] sm:$0xff] %vm1798, %v1783
  %1834 = vst.msk [vmem:[%s6 + $0x118] sm:$0xff] %vm1798, %v1784
  %1835 = vst.msk [vmem:[%s6 + $0x120] sm:$0xff] %vm1798, %v1785
  %1836 = vst.msk [vmem:[%s6 + $0x128] sm:$0xff] %vm1798, %v1786
  %1837 = vst.msk [vmem:[%s6 + $0x130] sm:$0xff] %vm1798, %v1787
  %1838 = vst.msk [vmem:[%s6 + $0x138] sm:$0xff] %vm1798, %v1788
  %1839 = vst.msk [vmem:[%s6 + $0x140] sm:$0xff] %vm1798, %v1789
  %1840 = vst.msk [vmem:[%s6 + $0x148] sm:$0xff] %vm1798, %v1790
  %1841 = vst.msk [vmem:[%s6 + $0x150] sm:$0xff] %vm1798, %v1791
  %1842 = vst.msk [vmem:[%s6 + $0x158] sm:$0xff] %vm1798, %v1792
  %1843 = vst.msk [vmem:[%s6 + $0x160] sm:$0xff] %vm1798, %v1793
  %1844 = vst.msk [vmem:[%s6 + $0x168] sm:$0xff] %vm1798, %v1794
  %1845 = vst.msk [vmem:[%s6 + $0x170] sm:$0xff] %vm1798, %v1795
  %1846 = vst.msk [vmem:[%s6 + $0x178] sm:$0xff] %vm1798, %v1796
  %1847 = vst.msk [vmem:[%s6 + $0x180] sm:$0xff] %vm1798, %v1797
  // Predicated region
  $region26: #{lenet_forward.3} parent=0 // pred_check
    _
  $region27: #{lenet_forward.3} parent=0 // pred_check_branch
    %1849 = sbr.rel (0) target = $region29
  $region28: #{lenet_forward.3} parent=0 // pred_region
    _
  $region29: #{lenet_forward.3} parent=0 // pred_fallthru
    _
  // Predicated region
  $region30: #{lenet_forward.3} parent=0 // pred_check
    _
  $region31: #{lenet_forward.3} parent=0 // pred_check_branch
    %1851 = sbr.rel (0) target = $region33
  $region32: #{lenet_forward.3} parent=0 // pred_region
    _
  $region33: #{lenet_forward.3} parent=0 // pred_fallthru
    _

// kernel: lenet_forward.4
$region0: #{lenet_forward.4}
  #allocation0 [shape = 'u32[]', space=smem, size = 0x4, offset = 0x4, fixed_abs, tag = 'smem constant byte address 0x4 - core index']
  #allocation1 [shape = 'u32[144,128]{1,0:T(1,128)}', space=vmem, size = 0x12000, scoped, tag = 'internal scratch']
  %s0 = inlined_call_operand.vmem [shape: f32[50,150], index: 0, kind: input, shape index: {}]
  %s1 = inlined_call_operand.vmem [shape: f32[50,150], index: 1, kind: input, shape index: {}]
  %s2 = inlined_call_operand.vmem [shape: f32[50,150], index: 2, kind: input, shape index: {}]
  %s3 = inlined_call_operand.vmem [shape: f32[50,150], index: 3, kind: input, shape index: {}]
  %s4 = inlined_call_operand.vmem [shape: bf16[150,16], index: 4, kind: input, shape index: {}]
  %s5 = inlined_call_operand.vmem [shape: f32[1,16], index: 5, kind: input, shape index: {}]
  %s6 = inlined_call_operand.vmem [shape: f32[50,16], index: 6, kind: output, shape index: {}]
  %s7 = sld [smem:[#allocation0]]
  $region34: #{lenet_forward.4} parent=0
    _
  %s9 = ssub.s32 1, %s7
  %s10 = scalar_select 0, %s9, %s7
  // Predicated region
  $region2: #{lenet_forward.4} parent=0 // pred_check
    _
  $region3: #{lenet_forward.4} parent=0 // pred_check_branch
    %12 = sbr.rel (0) target = $region5
  $region4: #{lenet_forward.4} parent=0 // pred_region
    _
  $region5: #{lenet_forward.4} parent=0 // pred_fallthru
    _
  // Predicated region
  $region6: #{lenet_forward.4} parent=0 // pred_check
    _
  $region7: #{lenet_forward.4} parent=0 // pred_check_branch
    %14 = sbr.rel (0) target = $region9
  $region8: #{lenet_forward.4} parent=0 // pred_region
    _
  $region9: #{lenet_forward.4} parent=0 // pred_fallthru
    _
  // Predicated region
  $region10: #{lenet_forward.4} parent=0 // pred_check
    _
  $region11: #{lenet_forward.4} parent=0 // pred_check_branch
    %16 = sbr.rel (0) target = $region13
  $region12: #{lenet_forward.4} parent=0 // pred_region
    _
  $region13: #{lenet_forward.4} parent=0 // pred_fallthru
    _
  // Predicated region
  $region14: #{lenet_forward.4} parent=0 // pred_check
    _
  $region15: #{lenet_forward.4} parent=0 // pred_check_branch
    %18 = sbr.rel (0) target = $region17
  $region16: #{lenet_forward.4} parent=0 // pred_region
    _
  $region17: #{lenet_forward.4} parent=0 // pred_fallthru
    _
  // Predicated region
  $region18: #{lenet_forward.4} parent=0 // pred_check
    _
  $region19: #{lenet_forward.4} parent=0 // pred_check_branch
    %20 = sbr.rel (0) target = $region21
  $region20: #{lenet_forward.4} parent=0 // pred_region
    _
  $region21: #{lenet_forward.4} parent=0 // pred_fallthru
    _
  // Predicated region
  $region22: #{lenet_forward.4} parent=0 // pred_check
    _
  $region23: #{lenet_forward.4} parent=0 // pred_check_branch
    %22 = sbr.rel (0) target = $region25
  $region24: #{lenet_forward.4} parent=0 // pred_region
    _
  $region25: #{lenet_forward.4} parent=0 // pred_fallthru
    _
  %v24 = vld [vmem:[%s4] sm:$0xf]
  %v25 = vld [vmem:[%s4 + $0x4] sm:$0xf]
  %v26 = vld [vmem:[%s4 + $0x8] sm:$0xf]
  %v27 = vld [vmem:[%s4 + $0xc] sm:$0xf]
  %v28 = vld [vmem:[%s4 + $0x10] sm:$0xf]
  %v29 = vld [vmem:[%s4 + $0x14] sm:$0xf]
  %v30 = vld [vmem:[%s4 + $0x18] sm:$0xf]
  %v31 = vld [vmem:[%s4 + $0x1c] sm:$0xf]
  %v32 = vld [vmem:[%s4 + $0x20] sm:$0xf]
  %v33 = vld [vmem:[%s4 + $0x24] sm:$0xf]
  %v34 = vld [vmem:[%s4 + $0x28] sm:$0xf]
  %v35 = vld [vmem:[%s4 + $0x2c] sm:$0xf]
  %v36 = vld [vmem:[%s4 + $0x30] sm:$0xf]
  %v37 = vld [vmem:[%s4 + $0x34] sm:$0xf]
  %v38 = vld [vmem:[%s4 + $0x38] sm:$0xf]
  %v39 = vld [vmem:[%s4 + $0x3c] sm:$0xf]
  %v40 = vld [vmem:[%s4 + $0x40] sm:$0xf]
  %v41 = vld [vmem:[%s4 + $0x44] sm:$0xf]
  %v42 = vld [vmem:[%s4 + $0x48] sm:$0x7]
  %v43 = vld [vmem:[%s5] sm:$0x1]
  %v44 = vld [vmem:[%s0] sm:$0xff]
  %v45 = vld [vmem:[%s0 + $0x8] sm:$0xff]
  %v46 = vld [vmem:[%s0 + $0x10] sm:$0xff]
  %v47 = vld [vmem:[%s0 + $0x18] sm:$0xff]
  %v48 = vld [vmem:[%s0 + $0x20] sm:$0xff]
  %v49 = vld [vmem:[%s0 + $0x28] sm:$0xff]
  %v50 = vld [vmem:[%s0 + $0x30] sm:$0xff]
  %v51 = vld [vmem:[%s0 + $0x38] sm:$0xff]
  %v52 = vld [vmem:[%s0 + $0x40] sm:$0xff]
  %v53 = vld [vmem:[%s0 + $0x48] sm:$0xff]
  %v54 = vld [vmem:[%s0 + $0x50] sm:$0xff]
  %v55 = vld [vmem:[%s0 + $0x58] sm:$0xff]
  %v56 = vld [vmem:[%s0 + $0x60] sm:$0x3]
  %v57 = vld [vmem:[%s0 + $0x68] sm:$0x3]
  %v58 = vpack.c.bf16 %v46, %v44
  %v59 = vpack.c.bf16 %v47, %v45
  %v60 = vpack.c.bf16 %v50, %v48
  %v61 = vpack.c.bf16 %v51, %v49
  %v62 = vpack.c.bf16 %v54, %v52
  %v63 = vpack.c.bf16 %v55, %v53
  %v64 = vpack.c.bf16 %v56, %v56
  %v65 = vpack.c.bf16 %v57, %v57
  %v67 = vlaneseq
  %v68 = vshrl.u32 %v67, 7
  %v69 = vsub.s32 0, %v68
  %v70 = vrot.slane %v43, %v69
  %v91 = vunpack.c.l.b16 %v24
  %v92 = vunpack.c.l.b16 %v25
  %v93 = vunpack.c.l.b16 %v26
  %v94 = vunpack.c.l.b16 %v27
  %v95 = vunpack.c.l.b16 %v28
  %v96 = vunpack.c.l.b16 %v29
  %v97 = vunpack.c.l.b16 %v30
  %v98 = vunpack.c.l.b16 %v31
  %v99 = vunpack.c.l.b16 %v32
  %v100 = vunpack.c.l.b16 %v33
  %v101 = vunpack.c.l.b16 %v34
  %v102 = vunpack.c.l.b16 %v35
  %v103 = vunpack.c.l.b16 %v36
  %v104 = vunpack.c.l.b16 %v37
  %v105 = vunpack.c.l.b16 %v38
  %v106 = vunpack.c.l.b16 %v39
  %v107 = vunpack.c.l.b16 %v40
  %v108 = vunpack.c.l.b16 %v41
  %v109 = vunpack.c.l.b16 %v42
  %v110 = vpack.c.b16 %v92, %v91
  %v111 = vpack.c.b16 %v94, %v93
  %v112 = vpack.c.b16 %v96, %v95
  %v113 = vpack.c.b16 %v98, %v97
  %v114 = vpack.c.b16 %v100, %v99
  %v115 = vpack.c.b16 %v102, %v101
  %v116 = vpack.c.b16 %v104, %v103
  %v117 = vpack.c.b16 %v106, %v105
  %v118 = vpack.c.b16 %v108, %v107
  %v119 = vpack.c.b16 %v109, %v109
  %vm129 = vcmask 179200
  %v131 = vsel %vm129, %v59, 0
  %v134 = vsel %vm129, %v61, 0
  %v137 = vsel %vm129, %v63, 0
  %v140 = vsel %vm129, %v65, 0
  %vm142 = vcmask 1042432
  %v144 = vsel %vm142, %v119, 0
  %146 = vmatprep.subr.bf16.mxu0 0
  %147 = vmatpush1.bf16.msra.mxu0 %v117
  %148 = vmatprep.subr.bf16.mxu0 0
  %149 = vmatpush1.bf16.msra.mxu0 %v116
  %150 = vmatprep.subr.bf16.mxu0 0
  %151 = vmatpush1.bf16.msra.mxu0 %v115
  %152 = vmatprep.subr.bf16.mxu0 0
  %153 = vmatpush1.bf16.msra.mxu0 %v114
  %154 = vmatprep.subr.bf16.mxu0 0
  %155 = vmatpush1.bf16.msra.mxu0 %v113
  %156 = vmatprep.subr.bf16.mxu0 0
  %157 = vmatpush1.bf16.msra.mxu0 %v112
  %158 = vmatprep.subr.bf16.mxu0 0
  %159 = vmatpush1.bf16.msra.mxu0 %v111
  %160 = vmatprep.subr.bf16.mxu0 0
  %161 = vmatpush1.bf16.msra.mxu0 %v110
  %162 = vmatprep.subr.bf16.mxu0 0
  %163 = vmatpush2.bf16.msra.mxu0 0
  %164 = vmatprep.subr.bf16.mxu0 0
  %165 = vmatpush2.bf16.msra.mxu0 0
  %166 = vmatprep.subr.bf16.mxu0 0
  %167 = vmatpush2.bf16.msra.mxu0 0
  %168 = vmatprep.subr.bf16.mxu0 0
  %169 = vmatpush2.bf16.msra.mxu0 0
  %170 = vmatprep.subr.bf16.mxu0 0
  %171 = vmatpush2.bf16.msra.mxu0 0
  %172 = vmatprep.subr.bf16.mxu0 0
  %173 = vmatpush2.bf16.msra.mxu0 0
  %174 = vmatprep.subr.bf16.mxu0 0
  %175 = vmatpush2.bf16.msra.mxu0 %v144
  %176 = vmatprep.subr.bf16.mxu0 0
  %177 = vmatpush2.bf16.msra.mxu0 %v118
  %178 = vmatprep.mubr.bf16.mxu0 %v131
  %179 = vmatmul.mubr.bf16.gmra.mxu0 %v58
  %v180 = vpop.f32.mrf.mxu0
  %v181 = vadd.f32 %v70, %v180
  %v182 = vpop.f32.mrf.mxu0
  %v183 = vpop.f32.mrf.mxu0
  %v184 = vadd.f32 %v70, %v183
  %v185 = vpop.f32.mrf.mxu0
  %186 = vmatprep.mubr.bf16.mxu0 %v134
  %187 = vmatmul.mubr.bf16.gmra.mxu0 %v60
  %v188 = vpop.f32.mrf.mxu0
  %v189 = vadd.f32 %v70, %v188
  %v190 = vpop.f32.mrf.mxu0
  %v191 = vpop.f32.mrf.mxu0
  %v192 = vadd.f32 %v70, %v191
  %v193 = vpop.f32.mrf.mxu0
  %194 = vmatprep.mubr.bf16.mxu0 %v137
  %195 = vmatmul.mubr.bf16.gmra.mxu0 %v62
  %v196 = vpop.f32.mrf.mxu0
  %v197 = vadd.f32 %v70, %v196
  %v198 = vpop.f32.mrf.mxu0
  %v199 = vpop.f32.mrf.mxu0
  %v200 = vadd.f32 %v70, %v199
  %v201 = vpop.f32.mrf.mxu0
  %202 = vmatprep.mubr.bf16.mxu0 %v140
  %203 = vmatmul.mubr.bf16.gmra.mxu0 %v64
  %v204 = vpop.f32.mrf.mxu0
  %v205 = vadd.f32 %v70, %v204
  %v206 = vpop.f32.mrf.mxu0
  %v207 = vpop.f32.mrf.mxu0
  %v208 = vpop.f32.mrf.mxu0
  %209 = vdwg.mxu0
  %v210 = vld [vmem:[%s1] sm:$0xff]
  %v211 = vld [vmem:[%s1 + $0x8] sm:$0xff]
  %v212 = vld [vmem:[%s1 + $0x10] sm:$0xff]
  %v213 = vld [vmem:[%s1 + $0x18] sm:$0xff]
  %v214 = vld [vmem:[%s1 + $0x20] sm:$0xff]
  %v215 = vld [vmem:[%s1 + $0x28] sm:$0xff]
  %v216 = vld [vmem:[%s1 + $0x30] sm:$0xff]
  %v217 = vld [vmem:[%s1 + $0x38] sm:$0xff]
  %v218 = vld [vmem:[%s1 + $0x40] sm:$0xff]
  %v219 = vld [vmem:[%s1 + $0x48] sm:$0xff]
  %v220 = vld [vmem:[%s1 + $0x50] sm:$0xff]
  %v221 = vld [vmem:[%s1 + $0x58] sm:$0xff]
  %v222 = vld [vmem:[%s1 + $0x60] sm:$0x3]
  %v223 = vld [vmem:[%s1 + $0x68] sm:$0x3]
  %v224 = vpack.c.bf16 %v212, %v210
  %v225 = vpack.c.bf16 %v213, %v211
  %v226 = vpack.c.bf16 %v216, %v214
  %v227 = vpack.c.bf16 %v217, %v215
  %v228 = vpack.c.bf16 %v220, %v218
  %v229 = vpack.c.bf16 %v221, %v219
  %v230 = vpack.c.bf16 %v222, %v222
  %v231 = vpack.c.bf16 %v223, %v223
  %v233 = vsel %vm129, %v225, 0
  %v236 = vsel %vm129, %v227, 0
  %v239 = vsel %vm129, %v229, 0
  %v242 = vsel %vm129, %v231, 0
  %244 = vmatprep.subr.bf16.mxu0 0
  %245 = vmatpush1.bf16.msra.mxu0 %v117
  %246 = vmatprep.subr.bf16.mxu0 0
  %247 = vmatpush1.bf16.msra.mxu0 %v116
  %248 = vmatprep.subr.bf16.mxu0 0
  %249 = vmatpush1.bf16.msra.mxu0 %v115
  %250 = vmatprep.subr.bf16.mxu0 0
  %251 = vmatpush1.bf16.msra.mxu0 %v114
  %252 = vmatprep.subr.bf16.mxu0 0
  %253 = vmatpush1.bf16.msra.mxu0 %v113
  %254 = vmatprep.subr.bf16.mxu0 0
  %255 = vmatpush1.bf16.msra.mxu0 %v112
  %256 = vmatprep.subr.bf16.mxu0 0
  %257 = vmatpush1.bf16.msra.mxu0 %v111
  %258 = vmatprep.subr.bf16.mxu0 0
  %259 = vmatpush1.bf16.msra.mxu0 %v110
  %260 = vmatprep.subr.bf16.mxu0 0
  %261 = vmatpush2.bf16.msra.mxu0 0
  %262 = vmatprep.subr.bf16.mxu0 0
  %263 = vmatpush2.bf16.msra.mxu0 0
  %264 = vmatprep.subr.bf16.mxu0 0
  %265 = vmatpush2.bf16.msra.mxu0 0
  %266 = vmatprep.subr.bf16.mxu0 0
  %267 = vmatpush2.bf16.msra.mxu0 0
  %268 = vmatprep.subr.bf16.mxu0 0
  %269 = vmatpush2.bf16.msra.mxu0 0
  %270 = vmatprep.subr.bf16.mxu0 0
  %271 = vmatpush2.bf16.msra.mxu0 0
  %272 = vmatprep.subr.bf16.mxu0 0
  %273 = vmatpush2.bf16.msra.mxu0 %v144
  %274 = vmatprep.subr.bf16.mxu0 0
  %275 = vmatpush2.bf16.msra.mxu0 %v118
  %276 = vmatprep.mubr.bf16.mxu0 %v233
  %277 = vmatmul.mubr.bf16.gmra.mxu0 %v224
  %v278 = vpop.f32.mrf.mxu0
  %v279 = vadd.f32 %v70, %v278
  %v280 = vpop.f32.mrf.mxu0
  %v281 = vpop.f32.mrf.mxu0
  %v282 = vadd.f32 %v70, %v281
  %v283 = vpop.f32.mrf.mxu0
  %284 = vmatprep.mubr.bf16.mxu0 %v236
  %285 = vmatmul.mubr.bf16.gmra.mxu0 %v226
  %v286 = vpop.f32.mrf.mxu0
  %v287 = vadd.f32 %v70, %v286
  %v288 = vpop.f32.mrf.mxu0
  %v289 = vpop.f32.mrf.mxu0
  %v290 = vadd.f32 %v70, %v289
  %v291 = vpop.f32.mrf.mxu0
  %292 = vmatprep.mubr.bf16.mxu0 %v239
  %293 = vmatmul.mubr.bf16.gmra.mxu0 %v228
  %v294 = vpop.f32.mrf.mxu0
  %v295 = vadd.f32 %v70, %v294
  %v296 = vpop.f32.mrf.mxu0
  %v297 = vpop.f32.mrf.mxu0
  %v298 = vadd.f32 %v70, %v297
  %v299 = vpop.f32.mrf.mxu0
  %300 = vmatprep.mubr.bf16.mxu0 %v242
  %301 = vmatmul.mubr.bf16.gmra.mxu0 %v230
  %v302 = vpop.f32.mrf.mxu0
  %v303 = vadd.f32 %v70, %v302
  %v304 = vpop.f32.mrf.mxu0
  %v305 = vpop.f32.mrf.mxu0
  %v306 = vpop.f32.mrf.mxu0
  %307 = vdwg.mxu0
  %v308 = vmax.f32 %v181, %v279
  %v309 = vmax.f32 %v184, %v282
  %v310 = vmax.f32 %v189, %v287
  %v311 = vmax.f32 %v192, %v290
  %v312 = vmax.f32 %v197, %v295
  %v313 = vmax.f32 %v200, %v298
  %v314 = vmax.f32 %v205, %v303
  %v315 = vld [vmem:[%s2] sm:$0xff]
  %v316 = vld [vmem:[%s2 + $0x8] sm:$0xff]
  %v317 = vld [vmem:[%s2 + $0x10] sm:$0xff]
  %v318 = vld [vmem:[%s2 + $0x18] sm:$0xff]
  %v319 = vld [vmem:[%s2 + $0x20] sm:$0xff]
  %v320 = vld [vmem:[%s2 + $0x28] sm:$0xff]
  %v321 = vld [vmem:[%s2 + $0x30] sm:$0xff]
  %v322 = vld [vmem:[%s2 + $0x38] sm:$0xff]
  %v323 = vld [vmem:[%s2 + $0x40] sm:$0xff]
  %v324 = vld [vmem:[%s2 + $0x48] sm:$0xff]
  %v325 = vld [vmem:[%s2 + $0x50] sm:$0xff]
  %v326 = vld [vmem:[%s2 + $0x58] sm:$0xff]
  %v327 = vld [vmem:[%s2 + $0x60] sm:$0x3]
  %v328 = vld [vmem:[%s2 + $0x68] sm:$0x3]
  %v329 = vpack.c.bf16 %v317, %v315
  %v330 = vpack.c.bf16 %v318, %v316
  %v331 = vpack.c.bf16 %v321, %v319
  %v332 = vpack.c.bf16 %v322, %v320
  %v333 = vpack.c.bf16 %v325, %v323
  %v334 = vpack.c.bf16 %v326, %v324
  %v335 = vpack.c.bf16 %v327, %v327
  %v336 = vpack.c.bf16 %v328, %v328
  %v338 = vsel %vm129, %v330, 0
  %v341 = vsel %vm129, %v332, 0
  %v344 = vsel %vm129, %v334, 0
  %v347 = vsel %vm129, %v336, 0
  %349 = vmatprep.subr.bf16.mxu0 0
  %350 = vmatpush1.bf16.msra.mxu0 %v117
  %351 = vmatprep.subr.bf16.mxu0 0
  %352 = vmatpush1.bf16.msra.mxu0 %v116
  %353 = vmatprep.subr.bf16.mxu0 0
  %354 = vmatpush1.bf16.msra.mxu0 %v115
  %355 = vmatprep.subr.bf16.mxu0 0
  %356 = vmatpush1.bf16.msra.mxu0 %v114
  %357 = vmatprep.subr.bf16.mxu0 0
  %358 = vmatpush1.bf16.msra.mxu0 %v113
  %359 = vmatprep.subr.bf16.mxu0 0
  %360 = vmatpush1.bf16.msra.mxu0 %v112
  %361 = vmatprep.subr.bf16.mxu0 0
  %362 = vmatpush1.bf16.msra.mxu0 %v111
  %363 = vmatprep.subr.bf16.mxu0 0
  %364 = vmatpush1.bf16.msra.mxu0 %v110
  %365 = vmatprep.subr.bf16.mxu0 0
  %366 = vmatpush2.bf16.msra.mxu0 0
  %367 = vmatprep.subr.bf16.mxu0 0
  %368 = vmatpush2.bf16.msra.mxu0 0
  %369 = vmatprep.subr.bf16.mxu0 0
  %370 = vmatpush2.bf16.msra.mxu0 0
  %371 = vmatprep.subr.bf16.mxu0 0
  %372 = vmatpush2.bf16.msra.mxu0 0
  %373 = vmatprep.subr.bf16.mxu0 0
  %374 = vmatpush2.bf16.msra.mxu0 0
  %375 = vmatprep.subr.bf16.mxu0 0
  %376 = vmatpush2.bf16.msra.mxu0 0
  %377 = vmatprep.subr.bf16.mxu0 0
  %378 = vmatpush2.bf16.msra.mxu0 %v144
  %379 = vmatprep.subr.bf16.mxu0 0
  %380 = vmatpush2.bf16.msra.mxu0 %v118
  %381 = vmatprep.mubr.bf16.mxu0 %v338
  %382 = vmatmul.mubr.bf16.gmra.mxu0 %v329
  %v383 = vpop.f32.mrf.mxu0
  %v384 = vadd.f32 %v70, %v383
  %v385 = vpop.f32.mrf.mxu0
  %v386 = vpop.f32.mrf.mxu0
  %v387 = vadd.f32 %v70, %v386
  %v388 = vpop.f32.mrf.mxu0
  %389 = vmatprep.mubr.bf16.mxu0 %v341
  %390 = vmatmul.mubr.bf16.gmra.mxu0 %v331
  %v391 = vpop.f32.mrf.mxu0
  %v392 = vadd.f32 %v70, %v391
  %v393 = vpop.f32.mrf.mxu0
  %v394 = vpop.f32.mrf.mxu0
  %v395 = vadd.f32 %v70, %v394
  %v396 = vpop.f32.mrf.mxu0
  %397 = vmatprep.mubr.bf16.mxu0 %v344
  %398 = vmatmul.mubr.bf16.gmra.mxu0 %v333
  %v399 = vpop.f32.mrf.mxu0
  %v400 = vadd.f32 %v70, %v399
  %v401 = vpop.f32.mrf.mxu0
  %v402 = vpop.f32.mrf.mxu0
  %v403 = vadd.f32 %v70, %v402
  %v404 = vpop.f32.mrf.mxu0
  %405 = vmatprep.mubr.bf16.mxu0 %v347
  %406 = vmatmul.mubr.bf16.gmra.mxu0 %v335
  %v407 = vpop.f32.mrf.mxu0
  %v408 = vadd.f32 %v70, %v407
  %v409 = vpop.f32.mrf.mxu0
  %v410 = vpop.f32.mrf.mxu0
  %v411 = vpop.f32.mrf.mxu0
  %412 = vdwg.mxu0
  %v413 = vld [vmem:[%s3] sm:$0xff]
  %v414 = vld [vmem:[%s3 + $0x8] sm:$0xff]
  %v415 = vld [vmem:[%s3 + $0x10] sm:$0xff]
  %v416 = vld [vmem:[%s3 + $0x18] sm:$0xff]
  %v417 = vld [vmem:[%s3 + $0x20] sm:$0xff]
  %v418 = vld [vmem:[%s3 + $0x28] sm:$0xff]
  %v419 = vld [vmem:[%s3 + $0x30] sm:$0xff]
  %v420 = vld [vmem:[%s3 + $0x38] sm:$0xff]
  %v421 = vld [vmem:[%s3 + $0x40] sm:$0xff]
  %v422 = vld [vmem:[%s3 + $0x48] sm:$0xff]
  %v423 = vld [vmem:[%s3 + $0x50] sm:$0xff]
  %v424 = vld [vmem:[%s3 + $0x58] sm:$0xff]
  %v425 = vld [vmem:[%s3 + $0x60] sm:$0x3]
  %v426 = vld [vmem:[%s3 + $0x68] sm:$0x3]
  %v427 = vpack.c.bf16 %v415, %v413
  %v428 = vpack.c.bf16 %v416, %v414
  %v429 = vpack.c.bf16 %v419, %v417
  %v430 = vpack.c.bf16 %v420, %v418
  %v431 = vpack.c.bf16 %v423, %v421
  %v432 = vpack.c.bf16 %v424, %v422
  %v433 = vpack.c.bf16 %v425, %v425
  %v434 = vpack.c.bf16 %v426, %v426
  %v436 = vsel %vm129, %v428, 0
  %v439 = vsel %vm129, %v430, 0
  %v442 = vsel %vm129, %v432, 0
  %v445 = vsel %vm129, %v434, 0
  %447 = vmatprep.subr.bf16.mxu0 0
  %448 = vmatpush1.bf16.msra.mxu0 %v117
  %449 = vmatprep.subr.bf16.mxu0 0
  %450 = vmatpush1.bf16.msra.mxu0 %v116
  %451 = vmatprep.subr.bf16.mxu0 0
  %452 = vmatpush1.bf16.msra.mxu0 %v115
  %453 = vmatprep.subr.bf16.mxu0 0
  %454 = vmatpush1.bf16.msra.mxu0 %v114
  %455 = vmatprep.subr.bf16.mxu0 0
  %456 = vmatpush1.bf16.msra.mxu0 %v113
  %457 = vmatprep.subr.bf16.mxu0 0
  %458 = vmatpush1.bf16.msra.mxu0 %v112
  %459 = vmatprep.subr.bf16.mxu0 0
  %460 = vmatpush1.bf16.msra.mxu0 %v111
  %461 = vmatprep.subr.bf16.mxu0 0
  %462 = vmatpush1.bf16.msra.mxu0 %v110
  %463 = vmatprep.subr.bf16.mxu0 0
  %464 = vmatpush2.bf16.msra.mxu0 0
  %465 = vmatprep.subr.bf16.mxu0 0
  %466 = vmatpush2.bf16.msra.mxu0 0
  %467 = vmatprep.subr.bf16.mxu0 0
  %468 = vmatpush2.bf16.msra.mxu0 0
  %469 = vmatprep.subr.bf16.mxu0 0
  %470 = vmatpush2.bf16.msra.mxu0 0
  %471 = vmatprep.subr.bf16.mxu0 0
  %472 = vmatpush2.bf16.msra.mxu0 0
  %473 = vmatprep.subr.bf16.mxu0 0
  %474 = vmatpush2.bf16.msra.mxu0 0
  %475 = vmatprep.subr.bf16.mxu0 0
  %476 = vmatpush2.bf16.msra.mxu0 %v144
  %477 = vmatprep.subr.bf16.mxu0 0
  %478 = vmatpush2.bf16.msra.mxu0 %v118
  %479 = vmatprep.mubr.bf16.mxu0 %v436
  %480 = vmatmul.mubr.bf16.gmra.mxu0 %v427
  %v481 = vpop.f32.mrf.mxu0
  %v482 = vadd.f32 %v70, %v481
  %v483 = vpop.f32.mrf.mxu0
  %v484 = vpop.f32.mrf.mxu0
  %v485 = vadd.f32 %v70, %v484
  %v486 = vpop.f32.mrf.mxu0
  %487 = vmatprep.mubr.bf16.mxu0 %v439
  %488 = vmatmul.mubr.bf16.gmra.mxu0 %v429
  %v489 = vpop.f32.mrf.mxu0
  %v490 = vadd.f32 %v70, %v489
  %v491 = vpop.f32.mrf.mxu0
  %v492 = vpop.f32.mrf.mxu0
  %v493 = vadd.f32 %v70, %v492
  %v494 = vpop.f32.mrf.mxu0
  %495 = vmatprep.mubr.bf16.mxu0 %v442
  %496 = vmatmul.mubr.bf16.gmra.mxu0 %v431
  %v497 = vpop.f32.mrf.mxu0
  %v498 = vadd.f32 %v70, %v497
  %v499 = vpop.f32.mrf.mxu0
  %v500 = vpop.f32.mrf.mxu0
  %v501 = vadd.f32 %v70, %v500
  %v502 = vpop.f32.mrf.mxu0
  %503 = vmatprep.mubr.bf16.mxu0 %v445
  %504 = vmatmul.mubr.bf16.gmra.mxu0 %v433
  %v505 = vpop.f32.mrf.mxu0
  %v506 = vadd.f32 %v70, %v505
  %v507 = vpop.f32.mrf.mxu0
  %v508 = vpop.f32.mrf.mxu0
  %v509 = vpop.f32.mrf.mxu0
  %510 = vdwg.mxu0
  %v511 = vmax.f32 %v384, %v482
  %v512 = vmax.f32 %v387, %v485
  %v513 = vmax.f32 %v392, %v490
  %v514 = vmax.f32 %v395, %v493
  %v515 = vmax.f32 %v400, %v498
  %v516 = vmax.f32 %v403, %v501
  %v517 = vmax.f32 %v408, %v506
  %v518 = vmax.f32 %v308, %v511
  %v519 = vmax.f32 %v309, %v512
  %v520 = vmax.f32 %v310, %v513
  %v521 = vmax.f32 %v311, %v514
  %v522 = vmax.f32 %v312, %v515
  %v523 = vmax.f32 %v313, %v516
  %v524 = vmax.f32 %v314, %v517
  %v525 = vmax.f32 %v518, 0.0
  %v526 = vmax.f32 %v519, 0.0
  %v527 = vmax.f32 %v520, 0.0
  %v528 = vmax.f32 %v521, 0.0
  %v529 = vmax.f32 %v522, 0.0
  %v530 = vmax.f32 %v523, 0.0
  %v531 = vmax.f32 %v524, 0.0
  %vm532 = vcmask 130048
  %533 = vst.msk [vmem:[%s6] sm:$0xff] %vm532, %v525
  %534 = vst.msk [vmem:[%s6 + $0x8] sm:$0xff] %vm532, %v526
  %535 = vst.msk [vmem:[%s6 + $0x10] sm:$0xff] %vm532, %v527
  %536 = vst.msk [vmem:[%s6 + $0x18] sm:$0xff] %vm532, %v528
  %537 = vst.msk [vmem:[%s6 + $0x20] sm:$0xff] %vm532, %v529
  %538 = vst.msk [vmem:[%s6 + $0x28] sm:$0xff] %vm532, %v530
  %vm539 = vcmask 123904
  %540 = vst.msk [vmem:[%s6 + $0x30] sm:$0x3] %vm539, %v531
  // Predicated region
  $region26: #{lenet_forward.4} parent=0 // pred_check
    _
  $region27: #{lenet_forward.4} parent=0 // pred_check_branch
    %542 = sbr.rel (0) target = $region29
  $region28: #{lenet_forward.4} parent=0 // pred_region
    _
  $region29: #{lenet_forward.4} parent=0 // pred_fallthru
    _
  // Predicated region
  $region30: #{lenet_forward.4} parent=0 // pred_check
    _
  $region31: #{lenet_forward.4} parent=0 // pred_check_branch
    %544 = sbr.rel (0) target = $region33
  $region32: #{lenet_forward.4} parent=0 // pred_region
    _
  $region33: #{lenet_forward.4} parent=0 // pred_fallthru
    _

// kernel: lenet_forward.5
$region0: #{lenet_forward.5}
  #allocation0 [shape = 'u32[]', space=smem, size = 0x4, offset = 0x4, fixed_abs, tag = 'smem constant byte address 0x4 - core index']
  #allocation1 [shape = 'u32[144,128]{1,0:T(1,128)}', space=vmem, size = 0x12000, scoped, tag = 'internal scratch']
  %s0 = inlined_call_operand.vmem [shape: f32[2,400], index: 0, kind: input, shape index: {}]
  %s1 = inlined_call_operand.vmem [shape: bf16[400,120], index: 1, kind: input, shape index: {}]
  %s2 = inlined_call_operand.vmem [shape: f32[1,120], index: 2, kind: input, shape index: {}]
  %s3 = inlined_call_operand.vmem [shape: bf16[120,84], index: 3, kind: input, shape index: {}]
  %s4 = inlined_call_operand.vmem [shape: f32[1,84], index: 4, kind: input, shape index: {}]
  %s5 = inlined_call_operand.vmem [shape: bf16[84,2], index: 5, kind: input, shape index: {}]
  %s6 = inlined_call_operand.vmem [shape: f32[1,2], index: 6, kind: input, shape index: {}]
  %s7 = inlined_call_operand.hbm [shape: f32[2,2], index: 7, kind: output, shape index: {}]
  %s8 = sld [smem:[#allocation0]]
  $region38: #{lenet_forward.5} parent=0
    _
  %s10 = ssub.s32 1, %s8
  %s11 = scalar_select 0, %s10, %s8
  $region1: #{lenet_forward.5} parent=0
    #allocation2 [shape = 'u8[1024]{0}', space=vmem, size = 0x400, scoped, tag = 'output window, operand 0, single buffered']
    #allocation3 [shape = 's32[1]{0}', space=sflag, size = 0x4, scoped, tag = 'scoped memory for lenet_forward.5']
    %12 = vsyncpa [#allocation3], 0
    // Predicated region
    $region2: #{lenet_forward.5} parent=1 // pred_check
      _
    $region3: #{lenet_forward.5} parent=1 // pred_check_branch
      %14 = sbr.rel (0) target = $region5
    $region4: #{lenet_forward.5} parent=1 // pred_region
      _
    $region5: #{lenet_forward.5} parent=1 // pred_fallthru
      _
    // Predicated region
    $region6: #{lenet_forward.5} parent=1 // pred_check
      _
    $region7: #{lenet_forward.5} parent=1 // pred_check_branch
      %16 = sbr.rel (0) target = $region9
    $region8: #{lenet_forward.5} parent=1 // pred_region
      _
    $region9: #{lenet_forward.5} parent=1 // pred_fallthru
      _
    // Predicated region
    $region10: #{lenet_forward.5} parent=1 // pred_check
      _
    $region11: #{lenet_forward.5} parent=1 // pred_check_branch
      %18 = sbr.rel (0) target = $region13
    $region12: #{lenet_forward.5} parent=1 // pred_region
      _
    $region13: #{lenet_forward.5} parent=1 // pred_fallthru
      _
    // Predicated region
    $region14: #{lenet_forward.5} parent=1 // pred_check
      _
    $region15: #{lenet_forward.5} parent=1 // pred_check_branch
      %20 = sbr.rel (0) target = $region17
    $region16: #{lenet_forward.5} parent=1 // pred_region
      _
    $region17: #{lenet_forward.5} parent=1 // pred_fallthru
      _
    // Predicated region
    $region18: #{lenet_forward.5} parent=1 // pred_check
      _
    $region19: #{lenet_forward.5} parent=1 // pred_check_branch
      %22 = sbr.rel (0) target = $region21
    $region20: #{lenet_forward.5} parent=1 // pred_region
      _
    $region21: #{lenet_forward.5} parent=1 // pred_fallthru
      _
    // Predicated region
    $region22: #{lenet_forward.5} parent=1 // pred_check
      _
    $region23: #{lenet_forward.5} parent=1 // pred_check_branch
      %24 = sbr.rel (0) target = $region25
    $region24: #{lenet_forward.5} parent=1 // pred_region
      _
    $region25: #{lenet_forward.5} parent=1 // pred_fallthru
      _
    // Predicated region
    $region26: #{lenet_forward.5} parent=1 // pred_check
      _
    $region27: #{lenet_forward.5} parent=1 // pred_check_branch
      %26 = sbr.rel (0) target = $region29
    $region28: #{lenet_forward.5} parent=1 // pred_region
      _
    $region29: #{lenet_forward.5} parent=1 // pred_fallthru
      _
    %v28 = vld [vmem:[%s0] sm:$0xff]
    %v30 = vcombine.high %v28, %v28
    %v32 = vunpack.c.l.s4 1983009808
    %v33 = vunpack.c.0.s8 %v32
    %v34 = vlaneseq
    %v35 = vshrl.u32 %v34, 7
    %v36 = vsub.s32 %v33, %v35
    %v37 = vrot.slane %v28, %v36
    %v39 = vunpack.c.l.s4 1983009808
    %v40 = vunpack.c.0.s8 %v39
    %v41 = vlaneseq
    %v42 = vshrl.u32 %v41, 7
    %v43 = vsub.s32 %v40, %v42
    %v44 = vrot.slane %v30, %v43
    %v45 = vcombine.high %v37, %v37
    %v46 = vcombine.high %v44, %v44
    %v51 = vpack.c.bf16 %v37, %v37
    %v52 = vpack.c.bf16 %v45, %v45
    %v53 = vpack.c.bf16 %v44, %v44
    %v54 = vpack.c.bf16 %v46, %v46
    %v55 = vld [vmem:[%s1] sm:$0xf]
    %v56 = vld [vmem:[%s1 + $0x4] sm:$0xf]
    %v57 = vld [vmem:[%s1 + $0x8] sm:$0xf]
    %v58 = vld [vmem:[%s1 + $0xc] sm:$0xf]
    %v59 = vld [vmem:[%s1 + $0x10] sm:$0xf]
    %v60 = vld [vmem:[%s1 + $0x14] sm:$0xf]
    %v61 = vld [vmem:[%s1 + $0x18] sm:$0xf]
    %v62 = vld [vmem:[%s1 + $0x1c] sm:$0xf]
    %v63 = vld [vmem:[%s1 + $0x20] sm:$0xf]
    %v64 = vld [vmem:[%s1 + $0x24] sm:$0xf]
    %v65 = vld [vmem:[%s1 + $0x28] sm:$0xf]
    %v66 = vld [vmem:[%s1 + $0x2c] sm:$0xf]
    %v67 = vld [vmem:[%s1 + $0x30] sm:$0xf]
    %v68 = vld [vmem:[%s1 + $0x34] sm:$0xf]
    %v69 = vld [vmem:[%s1 + $0x38] sm:$0xf]
    %v70 = vld [vmem:[%s1 + $0x3c] sm:$0xf]
    %v71 = vld [vmem:[%s1 + $0x40] sm:$0xf]
    %v72 = vld [vmem:[%s1 + $0x44] sm:$0xf]
    %v73 = vld [vmem:[%s1 + $0x48] sm:$0xf]
    %v74 = vld [vmem:[%s1 + $0x4c] sm:$0xf]
    %v75 = vld [vmem:[%s1 + $0x50] sm:$0xf]
    %v76 = vld [vmem:[%s1 + $0x54] sm:$0xf]
    %v77 = vld [vmem:[%s1 + $0x58] sm:$0xf]
    %v78 = vld [vmem:[%s1 + $0x5c] sm:$0xf]
    %v79 = vld [vmem:[%s1 + $0x60] sm:$0xf]
    %v80 = vld [vmem:[%s1 + $0x64] sm:$0xf]
    %v81 = vld [vmem:[%s1 + $0x68] sm:$0xf]
    %v82 = vld [vmem:[%s1 + $0x6c] sm:$0xf]
    %v83 = vld [vmem:[%s1 + $0x70] sm:$0xf]
    %v84 = vld [vmem:[%s1 + $0x74] sm:$0xf]
    %v85 = vld [vmem:[%s1 + $0x78] sm:$0xf]
    %v86 = vld [vmem:[%s1 + $0x7c] sm:$0xf]
    %v87 = vld [vmem:[%s1 + $0x80] sm:$0xf]
    %v88 = vld [vmem:[%s1 + $0x84] sm:$0xf]
    %v89 = vld [vmem:[%s1 + $0x88] sm:$0xf]
    %v90 = vld [vmem:[%s1 + $0x8c] sm:$0xf]
    %v91 = vld [vmem:[%s1 + $0x90] sm:$0xf]
    %v92 = vld [vmem:[%s1 + $0x94] sm:$0xf]
    %v93 = vld [vmem:[%s1 + $0x98] sm:$0xf]
    %v94 = vld [vmem:[%s1 + $0x9c] sm:$0xf]
    %v95 = vld [vmem:[%s1 + $0xa0] sm:$0xf]
    %v96 = vld [vmem:[%s1 + $0xa4] sm:$0xf]
    %v97 = vld [vmem:[%s1 + $0xa8] sm:$0xf]
    %v98 = vld [vmem:[%s1 + $0xac] sm:$0xf]
    %v99 = vld [vmem:[%s1 + $0xb0] sm:$0xf]
    %v100 = vld [vmem:[%s1 + $0xb4] sm:$0xf]
    %v101 = vld [vmem:[%s1 + $0xb8] sm:$0xf]
    %v102 = vld [vmem:[%s1 + $0xbc] sm:$0xf]
    %v103 = vld [vmem:[%s1 + $0xc0] sm:$0xf]
    %v104 = vld [vmem:[%s1 + $0xc4] sm:$0xf]
    %v105 = vld [vmem:[%s2] sm:$0x1]
    %v107 = vlaneseq
    %v108 = vshrl.u32 %v107, 7
    %v109 = vsub.s32 0, %v108
    %v110 = vrot.slane %v105, %v109
    %v162 = vunpack.c.l.b16 %v55
    %v163 = vunpack.c.l.b16 %v56
    %v164 = vunpack.c.l.b16 %v57
    %v165 = vunpack.c.l.b16 %v58
    %v166 = vunpack.c.l.b16 %v59
    %v167 = vunpack.c.l.b16 %v60
    %v168 = vunpack.c.l.b16 %v61
    %v169 = vunpack.c.l.b16 %v62
    %v170 = vunpack.c.l.b16 %v63
    %v171 = vunpack.c.l.b16 %v64
    %v172 = vunpack.c.l.b16 %v65
    %v173 = vunpack.c.l.b16 %v66
    %v174 = vunpack.c.l.b16 %v67
    %v175 = vunpack.c.l.b16 %v68
    %v176 = vunpack.c.l.b16 %v69
    %v177 = vunpack.c.l.b16 %v70
    %v178 = vunpack.c.l.b16 %v71
    %v179 = vunpack.c.l.b16 %v72
    %v180 = vunpack.c.l.b16 %v73
    %v181 = vunpack.c.l.b16 %v74
    %v182 = vunpack.c.l.b16 %v75
    %v183 = vunpack.c.l.b16 %v76
    %v184 = vunpack.c.l.b16 %v77
    %v185 = vunpack.c.l.b16 %v78
    %v186 = vunpack.c.l.b16 %v79
    %v187 = vunpack.c.l.b16 %v80
    %v188 = vunpack.c.l.b16 %v81
    %v189 = vunpack.c.l.b16 %v82
    %v190 = vunpack.c.l.b16 %v83
    %v191 = vunpack.c.l.b16 %v84
    %v192 = vunpack.c.l.b16 %v85
    %v193 = vunpack.c.l.b16 %v86
    %v194 = vunpack.c.l.b16 %v87
    %v195 = vunpack.c.l.b16 %v88
    %v196 = vunpack.c.l.b16 %v89
    %v197 = vunpack.c.l.b16 %v90
    %v198 = vunpack.c.l.b16 %v91
    %v199 = vunpack.c.l.b16 %v92
    %v200 = vunpack.c.l.b16 %v93
    %v201 = vunpack.c.l.b16 %v94
    %v202 = vunpack.c.l.b16 %v95
    %v203 = vunpack.c.l.b16 %v96
    %v204 = vunpack.c.l.b16 %v97
    %v205 = vunpack.c.l.b16 %v98
    %v206 = vunpack.c.l.b16 %v99
    %v207 = vunpack.c.l.b16 %v100
    %v208 = vunpack.c.l.b16 %v101
    %v209 = vunpack.c.l.b16 %v102
    %v210 = vunpack.c.l.b16 %v103
    %v211 = vunpack.c.l.b16 %v104
    %v212 = vpack.c.b16 %v163, %v162
    %v213 = vpack.c.b16 %v165, %v164
    %v214 = vpack.c.b16 %v167, %v166
    %v215 = vpack.c.b16 %v169, %v168
    %v216 = vpack.c.b16 %v171, %v170
    %v217 = vpack.c.b16 %v173, %v172
    %v218 = vpack.c.b16 %v175, %v174
    %v219 = vpack.c.b16 %v177, %v176
    %v220 = vpack.c.b16 %v179, %v178
    %v221 = vpack.c.b16 %v181, %v180
    %v222 = vpack.c.b16 %v183, %v182
    %v223 = vpack.c.b16 %v185, %v184
    %v224 = vpack.c.b16 %v187, %v186
    %v225 = vpack.c.b16 %v189, %v188
    %v226 = vpack.c.b16 %v191, %v190
    %v227 = vpack.c.b16 %v193, %v192
    %v228 = vpack.c.b16 %v195, %v194
    %v229 = vpack.c.b16 %v197, %v196
    %v230 = vpack.c.b16 %v199, %v198
    %v231 = vpack.c.b16 %v201, %v200
    %v232 = vpack.c.b16 %v203, %v202
    %v233 = vpack.c.b16 %v205, %v204
    %v234 = vpack.c.b16 %v207, %v206
    %v235 = vpack.c.b16 %v209, %v208
    %v236 = vpack.c.b16 %v211, %v210
    %vm262 = vcmask 130048
    %v264 = vsel %vm262, %v54, 0
    %266 = vmatprep.subr.bf16.mxu0 0
    %267 = vmatpush1.bf16.msra.mxu0 %v219
    %268 = vmatprep.subr.bf16.mxu0 0
    %269 = vmatpush1.bf16.msra.mxu0 %v218
    %270 = vmatprep.subr.bf16.mxu0 0
    %271 = vmatpush1.bf16.msra.mxu0 %v217
    %272 = vmatprep.subr.bf16.mxu0 0
    %273 = vmatpush1.bf16.msra.mxu0 %v216
    %274 = vmatprep.subr.bf16.mxu0 0
    %275 = vmatpush1.bf16.msra.mxu0 %v215
    %276 = vmatprep.subr.bf16.mxu0 0
    %277 = vmatpush1.bf16.msra.mxu0 %v214
    %278 = vmatprep.subr.bf16.mxu0 0
    %279 = vmatpush1.bf16.msra.mxu0 %v213
    %280 = vmatprep.subr.bf16.mxu0 0
    %281 = vmatpush1.bf16.msra.mxu0 %v212
    %282 = vmatprep.subr.bf16.mxu0 0
    %283 = vmatpush2.bf16.msra.mxu0 %v227
    %284 = vmatprep.subr.bf16.mxu0 0
    %285 = vmatpush2.bf16.msra.mxu0 %v226
    %286 = vmatprep.subr.bf16.mxu0 0
    %287 = vmatpush2.bf16.msra.mxu0 %v225
    %288 = vmatprep.subr.bf16.mxu0 0
    %289 = vmatpush2.bf16.msra.mxu0 %v224
    %290 = vmatprep.subr.bf16.mxu0 0
    %291 = vmatpush2.bf16.msra.mxu0 %v223
    %292 = vmatprep.subr.bf16.mxu0 0
    %293 = vmatpush2.bf16.msra.mxu0 %v222
    %294 = vmatprep.subr.bf16.mxu0 0
    %295 = vmatpush2.bf16.msra.mxu0 %v221
    %296 = vmatprep.subr.bf16.mxu0 0
    %297 = vmatpush2.bf16.msra.mxu0 %v220
    %298 = vmatprep.mubr.bf16.mxu0 %v52
    %299 = vmatmul.mubr.bf16.gmra.mxu0 %v51
    %v300 = vpop.f32.mrf.mxu0
    %v301 = vadd.f32 %v110, %v300
    %v302 = vpop.f32.mrf.mxu0
    %v303 = vpop.f32.mrf.mxu0
    %v304 = vpop.f32.mrf.mxu0
    %305 = vdwg.mxu0
    %306 = vmatprep.subr.bf16.mxu0 0
    %307 = vmatpush1.bf16.msra.mxu0 %v235
    %308 = vmatprep.subr.bf16.mxu0 0
    %309 = vmatpush1.bf16.msra.mxu0 %v234
    %310 = vmatprep.subr.bf16.mxu0 0
    %311 = vmatpush1.bf16.msra.mxu0 %v233
    %312 = vmatprep.subr.bf16.mxu0 0
    %313 = vmatpush1.bf16.msra.mxu0 %v232
    %314 = vmatprep.subr.bf16.mxu0 0
    %315 = vmatpush1.bf16.msra.mxu0 %v231
    %316 = vmatprep.subr.bf16.mxu0 0
    %317 = vmatpush1.bf16.msra.mxu0 %v230
    %318 = vmatprep.subr.bf16.mxu0 0
    %319 = vmatpush1.bf16.msra.mxu0 %v229
    %320 = vmatprep.subr.bf16.mxu0 0
    %321 = vmatpush1.bf16.msra.mxu0 %v228
    %322 = vmatprep.subr.bf16.mxu0 0
    %323 = vmatpush2.bf16.msra.mxu0 0
    %324 = vmatprep.subr.bf16.mxu0 0
    %325 = vmatpush2.bf16.msra.mxu0 0
    %326 = vmatprep.subr.bf16.mxu0 0
    %327 = vmatpush2.bf16.msra.mxu0 0
    %328 = vmatprep.subr.bf16.mxu0 0
    %329 = vmatpush2.bf16.msra.mxu0 0
    %330 = vmatprep.subr.bf16.mxu0 0
    %331 = vmatpush2.bf16.msra.mxu0 0
    %332 = vmatprep.subr.bf16.mxu0 0
    %333 = vmatpush2.bf16.msra.mxu0 0
    %334 = vmatprep.subr.bf16.mxu0 0
    %335 = vmatpush2.bf16.msra.mxu0 0
    %336 = vmatprep.subr.bf16.mxu0 0
    %337 = vmatpush2.bf16.msra.mxu0 %v236
    %338 = vmatprep.mubr.bf16.mxu0 %v264
    %339 = vmatmul.mubr.bf16.gmra.mxu0 %v53
    %v340 = vpop.f32.mrf.mxu0
    %v341 = vadd.f32 %v301, %v340
    %v342 = vpop.f32.mrf.mxu0
    %v343 = vpop.f32.mrf.mxu0
    %v344 = vpop.f32.mrf.mxu0
    %345 = vdwg.mxu0
    %v346 = vmax.f32 %v341, 0.0
    %v347 = vpack.c.bf16 %v346, %v346
    %v348 = vld [vmem:[%s3] sm:$0xf]
    %v349 = vld [vmem:[%s3 + $0x4] sm:$0xf]
    %v350 = vld [vmem:[%s3 + $0x8] sm:$0xf]
    %v351 = vld [vmem:[%s3 + $0xc] sm:$0xf]
    %v352 = vld [vmem:[%s3 + $0x10] sm:$0xf]
    %v353 = vld [vmem:[%s3 + $0x14] sm:$0xf]
    %v354 = vld [vmem:[%s3 + $0x18] sm:$0xf]
    %v355 = vld [vmem:[%s3 + $0x1c] sm:$0xf]
    %v356 = vld [vmem:[%s3 + $0x20] sm:$0xf]
    %v357 = vld [vmem:[%s3 + $0x24] sm:$0xf]
    %v358 = vld [vmem:[%s3 + $0x28] sm:$0xf]
    %v359 = vld [vmem:[%s3 + $0x2c] sm:$0xf]
    %v360 = vld [vmem:[%s3 + $0x30] sm:$0xf]
    %v361 = vld [vmem:[%s3 + $0x34] sm:$0xf]
    %v362 = vld [vmem:[%s3 + $0x38] sm:$0xf]
    %v363 = vld [vmem:[%s4] sm:$0x1]
    %v365 = vlaneseq
    %v366 = vshrl.u32 %v365, 7
    %v367 = vsub.s32 0, %v366
    %v368 = vrot.slane %v363, %v367
    %v385 = vunpack.c.l.b16 %v348
    %v386 = vunpack.c.l.b16 %v349
    %v387 = vunpack.c.l.b16 %v350
    %v388 = vunpack.c.l.b16 %v351
    %v389 = vunpack.c.l.b16 %v352
    %v390 = vunpack.c.l.b16 %v353
    %v391 = vunpack.c.l.b16 %v354
    %v392 = vunpack.c.l.b16 %v355
    %v393 = vunpack.c.l.b16 %v356
    %v394 = vunpack.c.l.b16 %v357
    %v395 = vunpack.c.l.b16 %v358
    %v396 = vunpack.c.l.b16 %v359
    %v397 = vunpack.c.l.b16 %v360
    %v398 = vunpack.c.l.b16 %v361
    %v399 = vunpack.c.l.b16 %v362
    %v400 = vpack.c.b16 %v386, %v385
    %v401 = vpack.c.b16 %v388, %v387
    %v402 = vpack.c.b16 %v390, %v389
    %v403 = vpack.c.b16 %v392, %v391
    %v404 = vpack.c.b16 %v394, %v393
    %v405 = vpack.c.b16 %v396, %v395
    %v406 = vpack.c.b16 %v398, %v397
    %v407 = vpack.c.b16 %v399, %v399
    %vm415 = vcmask 982016
    %v417 = vsel %vm415, %v347, 0
    %vm419 = vcmask 1043456
    %v421 = vsel %vm419, %v407, 0
    %423 = vmatprep.subr.bf16.mxu0 0
    %424 = vmatpush1.bf16.msra.mxu0 %v421
    %425 = vmatprep.subr.bf16.mxu0 0
    %426 = vmatpush1.bf16.msra.mxu0 %v406
    %427 = vmatprep.subr.bf16.mxu0 0
    %428 = vmatpush1.bf16.msra.mxu0 %v405
    %429 = vmatprep.subr.bf16.mxu0 0
    %430 = vmatpush1.bf16.msra.mxu0 %v404
    %431 = vmatprep.subr.bf16.mxu0 0
    %432 = vmatpush1.bf16.msra.mxu0 %v403
    %433 = vmatprep.subr.bf16.mxu0 0
    %434 = vmatpush1.bf16.msra.mxu0 %v402
    %435 = vmatprep.subr.bf16.mxu0 0
    %436 = vmatpush1.bf16.msra.mxu0 %v401
    %437 = vmatprep.subr.bf16.mxu0 0
    %438 = vmatpush1.bf16.msra.mxu0 %v400
    %439 = vmatprep.subr.bf16.mxu0 0
    %440 = vmatpush2.bf16.msra.mxu0 0
    %441 = vmatprep.subr.bf16.mxu0 0
    %442 = vmatpush2.bf16.msra.mxu0 0
    %443 = vmatprep.subr.bf16.mxu0 0
    %444 = vmatpush2.bf16.msra.mxu0 0
    %445 = vmatprep.subr.bf16.mxu0 0
    %446 = vmatpush2.bf16.msra.mxu0 0
    %447 = vmatprep.subr.bf16.mxu0 0
    %448 = vmatpush2.bf16.msra.mxu0 0
    %449 = vmatprep.subr.bf16.mxu0 0
    %450 = vmatpush2.bf16.msra.mxu0 0
    %451 = vmatprep.subr.bf16.mxu0 0
    %452 = vmatpush2.bf16.msra.mxu0 0
    %453 = vmatprep.subr.bf16.mxu0 0
    %454 = vmatpush2.bf16.msra.mxu0 0
    %455 = vmatprep.mubr.bf16.mxu0 0
    %456 = vmatmul.mubr.bf16.gmra.mxu0 %v417
    %v457 = vpop.f32.mrf.mxu0
    %v458 = vadd.f32 %v368, %v457
    %v459 = vpop.f32.mrf.mxu0
    %v460 = vpop.f32.mrf.mxu0
    %v461 = vpop.f32.mrf.mxu0
    %462 = vdwg.mxu0
    %v463 = vmax.f32 %v458, 0.0
    %v464 = vpack.c.bf16 %v463, %v463
    %v465 = vld [vmem:[%s5] sm:$0xf]
    %v466 = vld [vmem:[%s5 + $0x4] sm:$0xf]
    %v467 = vld [vmem:[%s5 + $0x8] sm:$0xf]
    %v468 = vld [vmem:[%s5 + $0xc] sm:$0xf]
    %v469 = vld [vmem:[%s5 + $0x10] sm:$0xf]
    %v470 = vld [vmem:[%s5 + $0x14] sm:$0xf]
    %v471 = vld [vmem:[%s5 + $0x18] sm:$0xf]
    %v472 = vld [vmem:[%s5 + $0x1c] sm:$0xf]
    %v473 = vld [vmem:[%s5 + $0x20] sm:$0xf]
    %v474 = vld [vmem:[%s5 + $0x24] sm:$0xf]
    %v475 = vld [vmem:[%s5 + $0x28] sm:$0x3]
    %v476 = vld [vmem:[%s6] sm:$0x1]
    %v478 = vlaneseq
    %v479 = vshrl.u32 %v478, 7
    %v480 = vsub.s32 0, %v479
    %v481 = vrot.slane %v476, %v480
    %v494 = vunpack.c.l.b16 %v465
    %v495 = vunpack.c.l.b16 %v466
    %v496 = vunpack.c.l.b16 %v467
    %v497 = vunpack.c.l.b16 %v468
    %v498 = vunpack.c.l.b16 %v469
    %v499 = vunpack.c.l.b16 %v470
    %v500 = vunpack.c.l.b16 %v471
    %v501 = vunpack.c.l.b16 %v472
    %v502 = vunpack.c.l.b16 %v473
    %v503 = vunpack.c.l.b16 %v474
    %v504 = vunpack.c.l.b16 %v475
    %v505 = vpack.c.b16 %v495, %v494
    %v506 = vpack.c.b16 %v497, %v496
    %v507 = vpack.c.b16 %v499, %v498
    %v508 = vpack.c.b16 %v501, %v500
    %v509 = vpack.c.b16 %v503, %v502
    %v510 = vpack.c.b16 %v504, %v504
    %vm516 = vcmask 687104
    %v518 = vsel %vm516, %v464, 0
    %vm520 = vcmask 1041408
    %v522 = vsel %vm520, %v510, 0
    %524 = vmatprep.subr.bf16.mxu0 0
    %525 = vmatpush1.bf16.msra.mxu0 0
    %526 = vmatprep.subr.bf16.mxu0 0
    %527 = vmatpush1.bf16.msra.mxu0 0
    %528 = vmatprep.subr.bf16.mxu0 0
    %529 = vmatpush1.bf16.msra.mxu0 %v522
    %530 = vmatprep.subr.bf16.mxu0 0
    %531 = vmatpush1.bf16.msra.mxu0 %v509
    %532 = vmatprep.subr.bf16.mxu0 0
    %533 = vmatpush1.bf16.msra.mxu0 %v508
    %534 = vmatprep.subr.bf16.mxu0 0
    %535 = vmatpush1.bf16.msra.mxu0 %v507
    %536 = vmatprep.subr.bf16.mxu0 0
    %537 = vmatpush1.bf16.msra.mxu0 %v506
    %538 = vmatprep.subr.bf16.mxu0 0
    %539 = vmatpush1.bf16.msra.mxu0 %v505
    %540 = vmatprep.subr.bf16.mxu0 0
    %541 = vmatpush2.bf16.msra.mxu0 0
    %542 = vmatprep.subr.bf16.mxu0 0
    %543 = vmatpush2.bf16.msra.mxu0 0
    %544 = vmatprep.subr.bf16.mxu0 0
    %545 = vmatpush2.bf16.msra.mxu0 0
    %546 = vmatprep.subr.bf16.mxu0 0
    %547 = vmatpush2.bf16.msra.mxu0 0
    %548 = vmatprep.subr.bf16.mxu0 0
    %549 = vmatpush2.bf16.msra.mxu0 0
    %550 = vmatprep.subr.bf16.mxu0 0
    %551 = vmatpush2.bf16.msra.mxu0 0
    %552 = vmatprep.subr.bf16.mxu0 0
    %553 = vmatpush2.bf16.msra.mxu0 0
    %554 = vmatprep.subr.bf16.mxu0 0
    %555 = vmatpush2.bf16.msra.mxu0 0
    %556 = vmatprep.mubr.bf16.mxu0 0
    %557 = vmatmul.mubr.bf16.gmra.mxu0 %v518
    %v558 = vpop.f32.mrf.mxu0
    %v559 = vadd.f32 %v481, %v558
    %v560 = vpop.f32.mrf.mxu0
    %v561 = vpop.f32.mrf.mxu0
    %v562 = vpop.f32.mrf.mxu0
    %563 = vdwg.mxu0
    %vm564 = vcmask 9216
    %565 = vst.msk [vmem:[#allocation2] sm:$0x3] %vm564, %v559
    // Predicated region
    $region30: #{lenet_forward.5} parent=1 // pred_check
      _
    $region31: #{lenet_forward.5} parent=1 // pred_check_branch
      %567 = sbr.rel (0) target = $region33
    $region32: #{lenet_forward.5} parent=1 // pred_region
      %s569 = ssub.s32 32, 32
      %570 = vsyncadd [#allocation3], %s569
      %s572 = sshll.u32 [#allocation2], 4
      %s573 = int_to_ptr.vmem [resolvable:$true] %s572
      %575 = dma.vmem_to_hbm [thread:$0]  %s573, 32, %s7, [#allocation3]
    $region33: #{lenet_forward.5} parent=1 // pred_fallthru
      _
    // Predicated region
    $region34: #{lenet_forward.5} parent=1 // pred_check
      _
    $region35: #{lenet_forward.5} parent=1 // pred_check_branch
      %577 = sbr.rel (0) target = $region37
    $region36: #{lenet_forward.5} parent=1 // pred_region
      %578 = dma.done [#allocation3], 32
    $region37: #{lenet_forward.5} parent=1 // pred_fallthru
      _
    %579 = vsyncpa [#allocation3], 1

</llo_original>
